<compile_context>
chip_gen: v7x
topology: tpu7x:2x2x1
jax: 0.10.0
libtpu: 0.0.40
codegen_flags: <defaults>
</compile_context>

<pallas_src>
import functools

import jax
import jax.numpy as jnp
from jax import lax
from jax.experimental import pallas as pl
from jax.experimental.pallas import tpu as pltpu

LN_EPS = 1e-5  # nn.LayerNorm default eps


# ----------------------------------------------------------------------------
# Kernel: grid step = (batch block i, head h).
# ----------------------------------------------------------------------------
def _mha_kernel(x_ref, bias_ref, w_ref,
                gamma_ref, beta_ref,
                wqkv_ref, bqkv_ref, wo_ref, bo_ref,
                o_ref, xn_sc, acc_sc,
                *, n_heads, attn_dim, batch_block, seq_len,
                compute_dtype, approx_recip):
    h = pl.program_id(1)
    Bblk, S, D = batch_block, seq_len, attn_dim
    Hd = n_heads * D
    cdt = compute_dtype

    # --- head 0: LayerNorm once per batch block, reset the Wo accumulator ---
    @pl.when(h == 0)
    def _():
        x = x_ref[...].reshape(Bblk * S, Hd)                    # f32 vector math
        mean = jnp.mean(x, axis=-1, keepdims=True)
        var = jnp.mean(jnp.square(x - mean), axis=-1, keepdims=True)
        xn = (x - mean) * lax.rsqrt(var + LN_EPS)
        xn = xn * gamma_ref[...] + beta_ref[...]
        xn_sc[...] = xn.astype(cdt).reshape(Bblk, S, Hd)
        acc_sc[...] = jnp.zeros_like(acc_sc)

    wqkv = wqkv_ref[0]          # (Hd, 3D) compute dtype, 1/sqrt(D) folded into Q cols
    bqkv = bqkv_ref[0]          # (1, 3D)  f32, scale folded into Q part
    wo_h = wo_ref[0]            # (D, Hd)  compute dtype

    def body(b, carry):
        xn_b = xn_sc[b]                                                  # (S, Hd)
        # Per-head fused QKV projection: full K = Hd contraction, N = 3D.
        qkv = jnp.dot(xn_b, wqkv,
                      preferred_element_type=jnp.float32) + bqkv         # (S, 3D) f32
        qh = qkv[:, 0 * D:1 * D].astype(cdt)
        kh = qkv[:, 1 * D:2 * D].astype(cdt)
        # Walk weight folded into the V rows (softmax denominator stays
        # UNWEIGHTED -- this matches the reference, where V is scaled before
        # softmax @ V; do not "fix" the denominator).
        vh = (qkv[:, 2 * D:3 * D] * w_ref[b]).astype(cdt)                # (S, D)
        # Scores: contract last axes of Q and K -> no XLU transpose of K.
        a = lax.dot_general(qh, kh, (((1,), (1,)), ((), ())),
                            preferred_element_type=jnp.float32)          # (S, S)
        a = a + bias_ref[b, 0].astype(jnp.float32)
        m = jnp.max(a, axis=-1, keepdims=True)
        p = jnp.exp(a - m)                                               # f32
        l = jnp.sum(p, axis=-1, keepdims=True)
        ctx = jnp.dot(p.astype(cdt), vh,
                      preferred_element_type=jnp.float32)                # (S, D)
        # Deferred softmax normalization on the small (S, D) tile.
        ctx = ctx * pl.reciprocal(l, approx=approx_recip)
        # Per-head output-projection accumulation (see TODO in header).
        acc_sc[b] += jnp.dot(ctx.astype(cdt), wo_h,
                             preferred_element_type=jnp.float32)         # (S, Hd)
        return carry

    if Bblk == 1:
        body(0, 0)
    else:
        lax.fori_loop(0, Bblk, body, 0, unroll=(Bblk <= 8))

    # --- last head: add output bias and write back ---------------------------
    @pl.when(h == n_heads - 1)
    def _():
        o_ref[...] = (acc_sc[...] + bo_ref[...]).astype(o_ref.dtype)


# ----------------------------------------------------------------------------
# Glue + pallas_call wrapper.
# ----------------------------------------------------------------------------
def _walk_weight(walk_nodes, n_nodes, seq_len):
    # TODO(synk): the integer scatter-add over walk_nodes is plain-JAX glue
    # (one-hot + sum), not inside the Pallas kernel.
    bs, walk_len = walk_nodes.shape
    onehot = jax.nn.one_hot(walk_nodes + 1, seq_len, dtype=jnp.float32)
    counts = onehot.sum(axis=1)                       # (bs, S)
    counts = counts.at[:, 0].set(walk_len / n_nodes)
    return counts / walk_len * n_nodes[:, None]       # (bs, S)


def _tpu_vmem_capacity_bytes():
    # Generation-aware budget: v7x has 64 MiB / TensorCore, v5e/v6e have 128.
    try:
        return int(pltpu.get_tpu_info().vmem_capacity_bytes)
    except Exception:
        return 128 << 20


def _pick_batch_block(bs, S, bias_itemsize, vmem_cap):
    small_vmem = vmem_cap <= (80 << 20)            # v7x-class (64 MiB / core)
    target_rows = 256 if small_vmem else 512       # M rows for the QKV matmul
    bias_budget = (12 << 20) if small_vmem else (40 << 20)

    bblk = max(1, min(bs, max(1, target_rows // max(S, 1))))
    # Keep the double-buffered per-head bias block inside its budget.
    while bblk > 1 and 2 * bblk * S * S * bias_itemsize > bias_budget:
        bblk -= 1
    while bs % bblk != 0:
        bblk -= 1
    if small_vmem:
        # v7x megacore: prefer an even number of batch grid steps so both
        # TensorCores stay busy on the last step.
        cand = bblk
        while cand > 1 and not (bs % cand == 0 and (bs // cand) % 2 == 0):
            cand -= 1
        if cand >= 1 and bs % cand == 0 and (bs // cand) % 2 == 0:
            bblk = cand
    return bblk


def _vmem_limit(Bblk, S, Hd, D, cdt, bias_itemsize, vmem_cap):
    c = jnp.dtype(cdt).itemsize
    blocks = (Bblk * S * Hd * 4                 # x block (f32)
              + Bblk * S * Hd * 4               # out block (f32)
              + Bblk * S * S * bias_itemsize    # per-head attn_bias block
              + Bblk * S * 4                    # walk weight
              + Hd * 3 * D * c + 3 * D * 4      # per-head Wqkv / bqkv
              + D * Hd * c                      # per-head Wo
              + 3 * Hd * 4)                     # gamma / beta / bo
    scratch = Bblk * S * Hd * (c + 4)           # xn (cdt) + acc (f32)
    est = 2 * blocks + scratch + (4 << 20)      # double-buffering + slack
    return int(min(max(32 << 20, est), int(vmem_cap * 0.85)))


def multi_head_attention(x, attn_bias, walk_nodes, n_nodes, params, n_heads,
                         *, compute_dtype=jnp.bfloat16, batch_block=None):
    bs, S, Hd = x.shape
    H = n_heads
    D = Hd // H
    gamma, beta, wq, bq, wk, bk, wv, bv, wo, bo = params
    cdt = compute_dtype

    vmem_cap = _tpu_vmem_capacity_bytes()

    # Ship attn_bias in the compute dtype (bf16 on the fast path): halves the
    # dominant HBM stream and the largest double-buffered VMEM block.
    bias = attn_bias.astype(cdt)
    bias_itemsize = jnp.dtype(bias.dtype).itemsize

    Bblk = batch_block if batch_block is not None else _pick_batch_block(
        bs, S, bias_itemsize, vmem_cap)
    assert bs % Bblk == 0

    # Per-row walk weight, folded into V inside the kernel.
    weight = _walk_weight(walk_nodes, n_nodes, S).reshape(bs, S, 1)

    # Per-head fused QKV weight/bias slabs; 1/sqrt(D) folded into the Q part.
    scale = D ** (-0.5)
    wq3 = (wq * scale).reshape(Hd, H, D)
    wk3 = wk.reshape(Hd, H, D)
    wv3 = wv.reshape(Hd, H, D)
    wqkv_heads = jnp.transpose(
        jnp.concatenate([wq3, wk3, wv3], axis=-1), (1, 0, 2)).astype(cdt)  # (H, Hd, 3D)
    bqkv_heads = jnp.concatenate(
        [(bq * scale).reshape(H, 1, D), bk.reshape(H, 1, D), bv.reshape(H, 1, D)],
        axis=-1)                                                           # (H, 1, 3D) f32
    wo_heads = wo.astype(cdt).reshape(H, D, Hd)                            # (H, D, Hd)
    gamma2, beta2, bo2 = gamma.reshape(1, Hd), beta.reshape(1, Hd), bo.reshape(1, Hd)

    kernel = functools.partial(
        _mha_kernel, n_heads=H, attn_dim=D, batch_block=Bblk, seq_len=S,
        compute_dtype=cdt,
        # Approximate EUP reciprocal only on the low-precision path (~1e-3
        # relative error on the softmax denominator).
        approx_recip=(cdt != jnp.float32))

    idx_batch3 = lambda i, h: (i, 0, 0)
    idx_bias = lambda i, h: (i, h, 0, 0)
    idx_head3 = lambda i, h: (h, 0, 0)
    idx_const2 = lambda i, h: (0, 0)

    return pl.pallas_call(
        kernel,
        out_shape=jax.ShapeDtypeStruct((bs, S, Hd), x.dtype),
        grid=(bs // Bblk, H),
        in_specs=[
            pl.BlockSpec((Bblk, S, Hd), idx_batch3),       # x (resident across h)
            pl.BlockSpec((Bblk, 1, S, S), idx_bias),       # attn_bias (per head)
            pl.BlockSpec((Bblk, S, 1), idx_batch3),        # walk weight
            pl.BlockSpec((1, Hd), idx_const2),             # ln gamma
            pl.BlockSpec((1, Hd), idx_const2),             # ln beta
            pl.BlockSpec((1, Hd, 3 * D), idx_head3),       # Wqkv (per head)
            pl.BlockSpec((1, 1, 3 * D), idx_head3),        # bqkv (per head)
            pl.BlockSpec((1, D, Hd), idx_head3),           # Wo (per head)
            pl.BlockSpec((1, Hd), idx_const2),             # bo
        ],
        out_specs=pl.BlockSpec((Bblk, S, Hd), idx_batch3),
        scratch_shapes=[
            pltpu.VMEM((Bblk, S, Hd), cdt),                # LayerNorm output
            pltpu.VMEM((Bblk, S, Hd), jnp.float32),        # Wo accumulator
        ],
        compiler_params=pltpu.CompilerParams(
            dimension_semantics=("parallel", "arbitrary"),
            vmem_limit_bytes=_vmem_limit(Bblk, S, Hd, D, cdt,
                                         bias_itemsize, vmem_cap)),
    )(x, bias, weight, gamma2, beta2, wqkv_heads, bqkv_heads, wo_heads, bo2)


# ----------------------------------------------------------------------------
# Pure-JAX reference (mirrors the PyTorch forward exactly).
# ----------------------------------------------------------------------------
def reference(x, attn_bias, walk_nodes, n_nodes, params, n_heads):
    gamma, beta, wq, bq, wk, bk, wv, bv, wo, bo = params
    bs, S, Hd = x.shape
    D = Hd // n_heads
    scale = D ** (-0.5)

    mean = x.mean(-1, keepdims=True)
    var = ((x - mean) ** 2).mean(-1, keepdims=True)
    xn = (x - mean) / jnp.sqrt(var + LN_EPS) * gamma + beta

    q = (xn @ wq + bq).reshape(bs, S, n_heads, D)
    k = (xn @ wk + bk).reshape(bs, S, n_heads, D)
    v = (xn @ wv + bv).reshape(bs, S, n_heads, D)

    weight = _walk_weight(walk_nodes, n_nodes, S)
    v = v * weight[:, :, None, None]

    q = q.transpose(0, 2, 1, 3)                       # (bs, H, S, D)
    k = k.transpose(0, 2, 3, 1)                       # (bs, H, D, S)
    v = v.transpose(0, 2, 1, 3)                       # (bs, H, S, D)

    attn = jnp.einsum('bhqd,bhdk->bhqk', q, k) * scale + attn_bias
    attn = jax.nn.softmax(attn, axis=-1)
    out = jnp.einsum('bhqk,bhkd->bhqd', attn, v)
    out = out.transpose(0, 2, 1, 3).reshape(bs, S, Hd)
    return out @ wo + bo


# ----------------------------------------------------------------------------
if __name__ == "__main__":
    bs, S, Hd, H = 2, 8, 32, 4
    walk_len = 6

    key = jax.random.PRNGKey(0)
    ks = jax.random.split(key, 12)

    x = jax.random.normal(ks[0], (bs, S, Hd), jnp.float32)
    attn_bias = 0.1 * jax.random.normal(ks[1], (bs, H, S, S), jnp.float32)
    walk_nodes = jax.random.randint(ks[2], (bs, walk_len), 0, S - 1)  # real nodes
    n_nodes = jnp.array([7.0, 5.0], jnp.float32)

    def init(k, shape, scale=0.1):
        return scale * jax.random.normal(k, shape, jnp.float32)

    gamma = 1.0 + init(ks[3], (Hd,))
    beta = init(ks[4], (Hd,))
    wq, bq = init(ks[5], (Hd, Hd)), init(ks[6], (Hd,))
    wk, bk = init(ks[7], (Hd, Hd)), init(ks[8], (Hd,))
    wv, bv = init(ks[9], (Hd, Hd)), init(ks[10], (Hd,))
    wo, bo = init(ks[11], (Hd, Hd)), jnp.zeros((Hd,), jnp.float32)
    params = (gamma, beta, wq, bq, wk, bk, wv, bv, wo, bo)

    ref = reference(x, attn_bias, walk_nodes, n_nodes, params, H)

    # f32 compute path: semantics check against the reference.
    out_f32 = multi_head_attention(x, attn_bias, walk_nodes, n_nodes, params, H,
                                   compute_dtype=jnp.float32)
    out_f32 = jax.block_until_ready(out_f32)
    assert out_f32.shape == (bs, S, Hd)
    assert jnp.allclose(out_f32, ref, atol=2e-2, rtol=2e-2), "f32 path mismatch"

    # bf16 MXU / bf16-bias path (default / fast): relaxed tolerance.
    out_bf16 = multi_head_attention(x, attn_bias, walk_nodes, n_nodes, params, H)
    out_bf16 = jax.block_until_ready(out_bf16)
    assert out_bf16.shape == (bs, S, Hd)
    assert jnp.allclose(out_bf16, ref, atol=3e-2, rtol=3e-2), "bf16 path mismatch"

    print("KERNEL_OK")
</pallas_src>

<mosaic_0001>
module attributes {stable_mosaic.version = 11 : i64} {
  func.func @_mha_kernel(%arg0: i32, %arg1: i32, %arg2: memref<2x8x32xf32, #tpu.memory_space<vmem>>, %arg3: memref<2x1x8x8xf32, #tpu.memory_space<vmem>>, %arg4: memref<2x8x1xf32, #tpu.memory_space<vmem>>, %arg5: memref<1x32xf32, #tpu.memory_space<vmem>>, %arg6: memref<1x32xf32, #tpu.memory_space<vmem>>, %arg7: memref<1x32x24xf32, #tpu.memory_space<vmem>>, %arg8: memref<1x1x24xf32, #tpu.memory_space<vmem>>, %arg9: memref<1x8x32xf32, #tpu.memory_space<vmem>>, %arg10: memref<1x32xf32, #tpu.memory_space<vmem>>, %arg11: memref<2x8x32xf32, #tpu.memory_space<vmem>>, %arg12: memref<2x8x32xf32, #tpu.memory_space<vmem>>, %arg13: memref<2x8x32xf32, #tpu.memory_space<vmem>>) attributes {dimension_semantics = [#tpu.dimension_semantics<parallel>, #tpu.dimension_semantics<arbitrary>], iteration_bounds = array<i64: 1, 4>, scalar_prefetch = 0 : i64, scratch_operands = 2 : i64, tpu.core_type = #tpu.core_type<tc>, window_params = [{transform_indices = @transform_0, window_bounds = array<i64: 2, 8, 32>}, {transform_indices = @transform_1, window_bounds = array<i64: 2, 1, 8, 8>}, {transform_indices = @transform_2, window_bounds = array<i64: 2, 8, 1>}, {pipeline_mode = #tpu.pipeline_mode<synchronous>, transform_indices = @transform_3, window_bounds = array<i64: 1, 32>}, {pipeline_mode = #tpu.pipeline_mode<synchronous>, transform_indices = @transform_4, window_bounds = array<i64: 1, 32>}, {transform_indices = @transform_5, window_bounds = array<i64: 1, 32, 24>}, {transform_indices = @transform_6, window_bounds = array<i64: 1, 1, 24>}, {transform_indices = @transform_7, window_bounds = array<i64: 1, 8, 32>}, {pipeline_mode = #tpu.pipeline_mode<synchronous>, transform_indices = @transform_8, window_bounds = array<i64: 1, 32>}, {transform_indices = @transform_9, window_bounds = array<i64: 2, 8, 32>}]} {
    %c0_i32 = arith.constant 0 : i32
    %0 = arith.cmpi eq, %arg1, %c0_i32 : i32
    %1 = arith.extui %0 : i1 to i32
    %c0_i32_0 = arith.constant 0 : i32
    %2 = arith.cmpi ne, %1, %c0_i32_0 : i32
    scf.if %2 {
      %c0_44 = arith.constant 0 : index
      %c0_45 = arith.constant 0 : index
      %c0_46 = arith.constant 0 : index
      %90 = vector.load %arg2[%c0_44, %c0_45, %c0_46] : memref<2x8x32xf32, #tpu.memory_space<vmem>>, vector<2x8x32xf32>
      %91 = vector.shape_cast %90 : vector<2x8x32xf32> to vector<16x32xf32>
      %cst_47 = arith.constant dense<0.000000e+00> : vector<16xf32>
      %92 = vector.multi_reduction <add>, %91, %cst_47 [1] : vector<16x32xf32> to vector<16xf32>
      %93 = vector.shape_cast %92 : vector<16xf32> to vector<16x1xf32>
      %cst_48 = arith.constant 3.200000e+01 : f32
      %94 = vector.broadcast %cst_48 : f32 to vector<16x1xf32>
      %95 = arith.divf %93, %94 : vector<16x1xf32>
      %96 = vector.broadcast %95 : vector<16x1xf32> to vector<16x32xf32>
      %97 = arith.subf %91, %96 : vector<16x32xf32>
      %98 = arith.mulf %97, %97 : vector<16x32xf32>
      %cst_49 = arith.constant dense<0.000000e+00> : vector<16xf32>
      %99 = vector.multi_reduction <add>, %98, %cst_49 [1] : vector<16x32xf32> to vector<16xf32>
      %100 = vector.shape_cast %99 : vector<16xf32> to vector<16x1xf32>
      %cst_50 = arith.constant 3.200000e+01 : f32
      %101 = vector.broadcast %cst_50 : f32 to vector<16x1xf32>
      %102 = arith.divf %100, %101 : vector<16x1xf32>
      %103 = vector.broadcast %95 : vector<16x1xf32> to vector<16x32xf32>
      %104 = arith.subf %91, %103 : vector<16x32xf32>
      %cst_51 = arith.constant 9.99999974E-6 : f32
      %105 = vector.broadcast %cst_51 : f32 to vector<16x1xf32>
      %106 = arith.addf %102, %105 : vector<16x1xf32>
      %107 = math.rsqrt %106 : vector<16x1xf32>
      %108 = vector.broadcast %107 : vector<16x1xf32> to vector<16x32xf32>
      %109 = arith.mulf %104, %108 : vector<16x32xf32>
      %c0_52 = arith.constant 0 : index
      %c0_53 = arith.constant 0 : index
      %110 = vector.load %arg5[%c0_52, %c0_53] : memref<1x32xf32, #tpu.memory_space<vmem>>, vector<1x32xf32>
      %111 = vector.broadcast %110 : vector<1x32xf32> to vector<16x32xf32>
      %112 = arith.mulf %109, %111 : vector<16x32xf32>
      %c0_54 = arith.constant 0 : index
      %c0_55 = arith.constant 0 : index
      %113 = vector.load %arg6[%c0_54, %c0_55] : memref<1x32xf32, #tpu.memory_space<vmem>>, vector<1x32xf32>
      %114 = vector.broadcast %113 : vector<1x32xf32> to vector<16x32xf32>
      %115 = arith.addf %112, %114 : vector<16x32xf32>
      %116 = vector.shape_cast %115 : vector<16x32xf32> to vector<2x8x32xf32>
      %c0_56 = arith.constant 0 : index
      %c0_57 = arith.constant 0 : index
      %c0_58 = arith.constant 0 : index
      %117 = vector.load %arg12[%c0_56, %c0_57, %c0_58] : memref<2x8x32xf32, #tpu.memory_space<vmem>>, vector<2x8x32xf32>
      tpu.vector_store %arg12[%c0_56, %c0_57, %c0_58], %116 {strides = array<i32>} : memref<2x8x32xf32, #tpu.memory_space<vmem>>, vector<2x8x32xf32>,
      %cst_59 = arith.constant 0.000000e+00 : f32
      %118 = vector.broadcast %cst_59 : f32 to vector<2x8x32xf32>
      %c0_60 = arith.constant 0 : index
      %c0_61 = arith.constant 0 : index
      %c0_62 = arith.constant 0 : index
      %119 = vector.load %arg13[%c0_60, %c0_61, %c0_62] : memref<2x8x32xf32, #tpu.memory_space<vmem>>, vector<2x8x32xf32>
      tpu.vector_store %arg13[%c0_60, %c0_61, %c0_62], %118 {strides = array<i32>} : memref<2x8x32xf32, #tpu.memory_space<vmem>>, vector<2x8x32xf32>,
    } else {
    }
    %c0 = arith.constant 0 : index
    %c0_1 = arith.constant 0 : index
    %c0_2 = arith.constant 0 : index
    %3 = vector.load %arg7[%c0, %c0_1, %c0_2] : memref<1x32x24xf32, #tpu.memory_space<vmem>>, vector<1x32x24xf32>
    %4 = vector.shape_cast %3 : vector<1x32x24xf32> to vector<32x24xf32>
    %c0_3 = arith.constant 0 : index
    %c0_4 = arith.constant 0 : index
    %c0_5 = arith.constant 0 : index
    %5 = vector.load %arg8[%c0_3, %c0_4, %c0_5] : memref<1x1x24xf32, #tpu.memory_space<vmem>>, vector<1x1x24xf32>
    %6 = vector.shape_cast %5 : vector<1x1x24xf32> to vector<1x24xf32>
    %c0_6 = arith.constant 0 : index
    %c0_7 = arith.constant 0 : index
    %c0_8 = arith.constant 0 : index
    %7 = vector.load %arg9[%c0_6, %c0_7, %c0_8] : memref<1x8x32xf32, #tpu.memory_space<vmem>>, vector<1x8x32xf32>
    %8 = vector.shape_cast %7 : vector<1x8x32xf32> to vector<8x32xf32>
    %c0_i32_9 = arith.constant 0 : i32
    %9 = arith.index_cast %c0_i32_9 : i32 to index
    %c0_10 = arith.constant 0 : index
    %c0_11 = arith.constant 0 : index
    %10 = vector.load %arg12[%9, %c0_10, %c0_11] : memref<2x8x32xf32, #tpu.memory_space<vmem>>, vector<1x8x32xf32>
    %11 = vector.shape_cast %10 : vector<1x8x32xf32> to vector<8x32xf32>
    %cst = arith.constant dense<0.000000e+00> : vector<8x24xf32>
    %12 = tpu.matmul %11, %4, %cst {dimension_numbers = #tpu.dot_dimension_numbers<[1], [0], [0], [1], [0, 0, 1, 1], [], []>} : vector<8x32xf32>, vector<32x24xf32>, vector<8x24xf32> -> vector<8x24xf32>
    %13 = vector.broadcast %6 : vector<1x24xf32> to vector<8x24xf32>
    %14 = arith.addf %12, %13 : vector<8x24xf32>
    %15 = vector.extract_strided_slice %14 {offsets = [0, 0], sizes = [8, 8], strides = [1, 1]} : vector<8x24xf32> to vector<8x8xf32>
    %16 = vector.extract_strided_slice %14 {offsets = [0, 8], sizes = [8, 8], strides = [1, 1]} : vector<8x24xf32> to vector<8x8xf32>
    %17 = vector.extract_strided_slice %14 {offsets = [0, 16], sizes = [8, 8], strides = [1, 1]} : vector<8x24xf32> to vector<8x8xf32>
    %18 = arith.index_cast %c0_i32_9 : i32 to index
    %c0_12 = arith.constant 0 : index
    %c0_13 = arith.constant 0 : index
    %19 = vector.load %arg4[%18, %c0_12, %c0_13] : memref<2x8x1xf32, #tpu.memory_space<vmem>>, vector<1x8x1xf32>
    %20 = vector.shape_cast %19 : vector<1x8x1xf32> to vector<8x1xf32>
    %21 = vector.broadcast %20 : vector<8x1xf32> to vector<8x8xf32>
    %22 = arith.mulf %17, %21 : vector<8x8xf32>
    %cst_14 = arith.constant dense<0.000000e+00> : vector<8x8xf32>
    %23 = tpu.matmul %15, %16, %cst_14 {dimension_numbers = #tpu.dot_dimension_numbers<[1], [1], [0], [0], [0, 0, 1, 0], [], []>} : vector<8x8xf32>, vector<8x8xf32>, vector<8x8xf32> -> vector<8x8xf32>
    %24 = arith.index_cast %c0_i32_9 : i32 to index
    %c0_15 = arith.constant 0 : index
    %c0_16 = arith.constant 0 : index
    %c0_17 = arith.constant 0 : index
    %25 = vector.load %arg3[%24, %c0_15, %c0_16, %c0_17] : memref<2x1x8x8xf32, #tpu.memory_space<vmem>>, vector<1x1x8x8xf32>
    %26 = vector.shape_cast %25 : vector<1x1x8x8xf32> to vector<8x8xf32>
    %27 = arith.addf %23, %26 : vector<8x8xf32>
    %cst_18 = arith.constant dense<0xFF800000> : vector<8xf32>
    %28 = vector.multi_reduction <maximumf>, %27, %cst_18 [1] : vector<8x8xf32> to vector<8xf32>
    %29 = vector.shape_cast %28 : vector<8xf32> to vector<8x1xf32>
    %30 = vector.broadcast %29 : vector<8x1xf32> to vector<8x8xf32>
    %31 = arith.subf %27, %30 : vector<8x8xf32>
    %32 = math.exp %31 : vector<8x8xf32>
    %cst_19 = arith.constant dense<0.000000e+00> : vector<8xf32>
    %33 = vector.multi_reduction <add>, %32, %cst_19 [1] : vector<8x8xf32> to vector<8xf32>
    %34 = vector.shape_cast %33 : vector<8xf32> to vector<8x1xf32>
    %cst_20 = arith.constant dense<0.000000e+00> : vector<8x8xf32>
    %35 = tpu.matmul %32, %22, %cst_20 {dimension_numbers = #tpu.dot_dimension_numbers<[1], [0], [0], [1], [0, 0, 1, 1], [], []>} : vector<8x8xf32>, vector<8x8xf32>, vector<8x8xf32> -> vector<8x8xf32>
    %36 = tpu.reciprocal %34 : vector<8x1xf32> -> vector<8x1xf32>
    %37 = vector.broadcast %36 : vector<8x1xf32> to vector<8x8xf32>
    %38 = arith.mulf %35, %37 : vector<8x8xf32>
    %39 = arith.index_cast %c0_i32_9 : i32 to index
    %c0_21 = arith.constant 0 : index
    %c0_22 = arith.constant 0 : index
    %40 = vector.load %arg13[%39, %c0_21, %c0_22] : memref<2x8x32xf32, #tpu.memory_space<vmem>>, vector<1x8x32xf32>
    %41 = vector.shape_cast %40 : vector<1x8x32xf32> to vector<8x32xf32>
    %cst_23 = arith.constant dense<0.000000e+00> : vector<8x32xf32>
    %42 = tpu.matmul %38, %8, %cst_23 {dimension_numbers = #tpu.dot_dimension_numbers<[1], [0], [0], [1], [0, 0, 1, 1], [], []>} : vector<8x8xf32>, vector<8x32xf32>, vector<8x32xf32> -> vector<8x32xf32>
    %43 = arith.addf %41, %42 : vector<8x32xf32>
    %44 = arith.index_cast %c0_i32_9 : i32 to index
    %c0_24 = arith.constant 0 : index
    %c0_25 = arith.constant 0 : index
    %45 = vector.load %arg13[%44, %c0_24, %c0_25] : memref<2x8x32xf32, #tpu.memory_space<vmem>>, vector<1x8x32xf32>
    %46 = vector.shape_cast %45 : vector<1x8x32xf32> to vector<8x32xf32>
    %47 = vector.shape_cast %43 : vector<8x32xf32> to vector<1x8x32xf32>
    tpu.vector_store %arg13[%44, %c0_24, %c0_25], %47 {strides = array<i32>} : memref<2x8x32xf32, #tpu.memory_space<vmem>>, vector<1x8x32xf32>,
    %c1_i32 = arith.constant 1 : i32
    %48 = arith.index_cast %c1_i32 : i32 to index
    %c0_26 = arith.constant 0 : index
    %c0_27 = arith.constant 0 : index
    %49 = vector.load %arg12[%48, %c0_26, %c0_27] : memref<2x8x32xf32, #tpu.memory_space<vmem>>, vector<1x8x32xf32>
    %50 = vector.shape_cast %49 : vector<1x8x32xf32> to vector<8x32xf32>
    %cst_28 = arith.constant dense<0.000000e+00> : vector<8x24xf32>
    %51 = tpu.matmul %50, %4, %cst_28 {dimension_numbers = #tpu.dot_dimension_numbers<[1], [0], [0], [1], [0, 0, 1, 1], [], []>} : vector<8x32xf32>, vector<32x24xf32>, vector<8x24xf32> -> vector<8x24xf32>
    %52 = vector.broadcast %6 : vector<1x24xf32> to vector<8x24xf32>
    %53 = arith.addf %51, %52 : vector<8x24xf32>
    %54 = vector.extract_strided_slice %53 {offsets = [0, 0], sizes = [8, 8], strides = [1, 1]} : vector<8x24xf32> to vector<8x8xf32>
    %55 = vector.extract_strided_slice %53 {offsets = [0, 8], sizes = [8, 8], strides = [1, 1]} : vector<8x24xf32> to vector<8x8xf32>
    %56 = vector.extract_strided_slice %53 {offsets = [0, 16], sizes = [8, 8], strides = [1, 1]} : vector<8x24xf32> to vector<8x8xf32>
    %57 = arith.index_cast %c1_i32 : i32 to index
    %c0_29 = arith.constant 0 : index
    %c0_30 = arith.constant 0 : index
    %58 = vector.load %arg4[%57, %c0_29, %c0_30] : memref<2x8x1xf32, #tpu.memory_space<vmem>>, vector<1x8x1xf32>
    %59 = vector.shape_cast %58 : vector<1x8x1xf32> to vector<8x1xf32>
    %60 = vector.broadcast %59 : vector<8x1xf32> to vector<8x8xf32>
    %61 = arith.mulf %56, %60 : vector<8x8xf32>
    %cst_31 = arith.constant dense<0.000000e+00> : vector<8x8xf32>
    %62 = tpu.matmul %54, %55, %cst_31 {dimension_numbers = #tpu.dot_dimension_numbers<[1], [1], [0], [0], [0, 0, 1, 0], [], []>} : vector<8x8xf32>, vector<8x8xf32>, vector<8x8xf32> -> vector<8x8xf32>
    %63 = arith.index_cast %c1_i32 : i32 to index
    %c0_32 = arith.constant 0 : index
    %c0_33 = arith.constant 0 : index
    %c0_34 = arith.constant 0 : index
    %64 = vector.load %arg3[%63, %c0_32, %c0_33, %c0_34] : memref<2x1x8x8xf32, #tpu.memory_space<vmem>>, vector<1x1x8x8xf32>
    %65 = vector.shape_cast %64 : vector<1x1x8x8xf32> to vector<8x8xf32>
    %66 = arith.addf %62, %65 : vector<8x8xf32>
    %cst_35 = arith.constant dense<0xFF800000> : vector<8xf32>
    %67 = vector.multi_reduction <maximumf>, %66, %cst_35 [1] : vector<8x8xf32> to vector<8xf32>
    %68 = vector.shape_cast %67 : vector<8xf32> to vector<8x1xf32>
    %69 = vector.broadcast %68 : vector<8x1xf32> to vector<8x8xf32>
    %70 = arith.subf %66, %69 : vector<8x8xf32>
    %71 = math.exp %70 : vector<8x8xf32>
    %cst_36 = arith.constant dense<0.000000e+00> : vector<8xf32>
    %72 = vector.multi_reduction <add>, %71, %cst_36 [1] : vector<8x8xf32> to vector<8xf32>
    %73 = vector.shape_cast %72 : vector<8xf32> to vector<8x1xf32>
    %cst_37 = arith.constant dense<0.000000e+00> : vector<8x8xf32>
    %74 = tpu.matmul %71, %61, %cst_37 {dimension_numbers = #tpu.dot_dimension_numbers<[1], [0], [0], [1], [0, 0, 1, 1], [], []>} : vector<8x8xf32>, vector<8x8xf32>, vector<8x8xf32> -> vector<8x8xf32>
    %75 = tpu.reciprocal %73 : vector<8x1xf32> -> vector<8x1xf32>
    %76 = vector.broadcast %75 : vector<8x1xf32> to vector<8x8xf32>
    %77 = arith.mulf %74, %76 : vector<8x8xf32>
    %78 = arith.index_cast %c1_i32 : i32 to index
    %c0_38 = arith.constant 0 : index
    %c0_39 = arith.constant 0 : index
    %79 = vector.load %arg13[%78, %c0_38, %c0_39] : memref<2x8x32xf32, #tpu.memory_space<vmem>>, vector<1x8x32xf32>
    %80 = vector.shape_cast %79 : vector<1x8x32xf32> to vector<8x32xf32>
    %cst_40 = arith.constant dense<0.000000e+00> : vector<8x32xf32>
    %81 = tpu.matmul %77, %8, %cst_40 {dimension_numbers = #tpu.dot_dimension_numbers<[1], [0], [0], [1], [0, 0, 1, 1], [], []>} : vector<8x8xf32>, vector<8x32xf32>, vector<8x32xf32> -> vector<8x32xf32>
    %82 = arith.addf %80, %81 : vector<8x32xf32>
    %83 = arith.index_cast %c1_i32 : i32 to index
    %c0_41 = arith.constant 0 : index
    %c0_42 = arith.constant 0 : index
    %84 = vector.load %arg13[%83, %c0_41, %c0_42] : memref<2x8x32xf32, #tpu.memory_space<vmem>>, vector<1x8x32xf32>
    %85 = vector.shape_cast %84 : vector<1x8x32xf32> to vector<8x32xf32>
    %86 = vector.shape_cast %82 : vector<8x32xf32> to vector<1x8x32xf32>
    tpu.vector_store %arg13[%83, %c0_41, %c0_42], %86 {strides = array<i32>} : memref<2x8x32xf32, #tpu.memory_space<vmem>>, vector<1x8x32xf32>,
    %c2_i32 = arith.constant 2 : i32
    %c3_i32 = arith.constant 3 : i32
    %87 = arith.cmpi eq, %arg1, %c3_i32 : i32
    %88 = arith.extui %87 : i1 to i32
    %c0_i32_43 = arith.constant 0 : i32
    %89 = arith.cmpi ne, %88, %c0_i32_43 : i32
    scf.if %89 {
      %c0_44 = arith.constant 0 : index
      %c0_45 = arith.constant 0 : index
      %c0_46 = arith.constant 0 : index
      %90 = vector.load %arg13[%c0_44, %c0_45, %c0_46] : memref<2x8x32xf32, #tpu.memory_space<vmem>>, vector<2x8x32xf32>
      %c0_47 = arith.constant 0 : index
      %c0_48 = arith.constant 0 : index
      %91 = vector.load %arg10[%c0_47, %c0_48] : memref<1x32xf32, #tpu.memory_space<vmem>>, vector<1x32xf32>
      %92 = vector.shape_cast %91 : vector<1x32xf32> to vector<1x1x32xf32>
      %93 = vector.broadcast %92 : vector<1x1x32xf32> to vector<2x8x32xf32>
      %94 = arith.addf %90, %93 : vector<2x8x32xf32>
      %c0_49 = arith.constant 0 : index
      %c0_50 = arith.constant 0 : index
      %c0_51 = arith.constant 0 : index
      %95 = vector.load %arg11[%c0_49, %c0_50, %c0_51] : memref<2x8x32xf32, #tpu.memory_space<vmem>>, vector<2x8x32xf32>
      tpu.vector_store %arg11[%c0_49, %c0_50, %c0_51], %94 {strides = array<i32>} : memref<2x8x32xf32, #tpu.memory_space<vmem>>, vector<2x8x32xf32>,
    } else {
    }
    return
  }
  func.func @transform_0(%arg0: i32, %arg1: i32) -> (i32, i32, i32) {
    %c0_i32 = arith.constant 0 : i32
    %c0_i32_0 = arith.constant 0 : i32
    %c0_i32_1 = arith.constant 0 : i32
    return %arg0, %c0_i32, %c0_i32_0 : i32, i32, i32
  }
  func.func @transform_1(%arg0: i32, %arg1: i32) -> (i32, i32, i32, i32) {
    %c0_i32 = arith.constant 0 : i32
    %c0_i32_0 = arith.constant 0 : i32
    %c0_i32_1 = arith.constant 0 : i32
    return %arg0, %arg1, %c0_i32, %c0_i32_0 : i32, i32, i32, i32
  }
  func.func @transform_2(%arg0: i32, %arg1: i32) -> (i32, i32, i32) {
    %c0_i32 = arith.constant 0 : i32
    %c0_i32_0 = arith.constant 0 : i32
    %c0_i32_1 = arith.constant 0 : i32
    return %arg0, %c0_i32, %c0_i32_0 : i32, i32, i32
  }
  func.func @transform_3(%arg0: i32, %arg1: i32) -> (i32, i32) {
    %c0_i32 = arith.constant 0 : i32
    %c0_i32_0 = arith.constant 0 : i32
    %c0_i32_1 = arith.constant 0 : i32
    return %c0_i32, %c0_i32_0 : i32, i32
  }
  func.func @transform_4(%arg0: i32, %arg1: i32) -> (i32, i32) {
    %c0_i32 = arith.constant 0 : i32
    %c0_i32_0 = arith.constant 0 : i32
    %c0_i32_1 = arith.constant 0 : i32
    return %c0_i32, %c0_i32_0 : i32, i32
  }
  func.func @transform_5(%arg0: i32, %arg1: i32) -> (i32, i32, i32) {
    %c0_i32 = arith.constant 0 : i32
    %c0_i32_0 = arith.constant 0 : i32
    %c0_i32_1 = arith.constant 0 : i32
    return %arg1, %c0_i32, %c0_i32_0 : i32, i32, i32
  }
  func.func @transform_6(%arg0: i32, %arg1: i32) -> (i32, i32, i32) {
    %c0_i32 = arith.constant 0 : i32
    %c0_i32_0 = arith.constant 0 : i32
    %c0_i32_1 = arith.constant 0 : i32
    return %arg1, %c0_i32, %c0_i32_0 : i32, i32, i32
  }
  func.func @transform_7(%arg0: i32, %arg1: i32) -> (i32, i32, i32) {
    %c0_i32 = arith.constant 0 : i32
    %c0_i32_0 = arith.constant 0 : i32
    %c0_i32_1 = arith.constant 0 : i32
    return %arg1, %c0_i32, %c0_i32_0 : i32, i32, i32
  }
  func.func @transform_8(%arg0: i32, %arg1: i32) -> (i32, i32) {
    %c0_i32 = arith.constant 0 : i32
    %c0_i32_0 = arith.constant 0 : i32
    %c0_i32_1 = arith.constant 0 : i32
    return %c0_i32, %c0_i32_0 : i32, i32
  }
  func.func @transform_9(%arg0: i32, %arg1: i32) -> (i32, i32, i32) {
    %c0_i32 = arith.constant 0 : i32
    %c0_i32_0 = arith.constant 0 : i32
    %c0_i32_1 = arith.constant 0 : i32
    return %arg0, %c0_i32, %c0_i32_0 : i32, i32, i32
  }
}

</mosaic_0001>

<llo_original>
// kernel: tpu_custom_call.1
$region0: #{tpu_custom_call.1}
  #allocation0 [shape = 'u32[]', space=smem, size = 0x4, offset = 0x4, fixed_abs, tag = 'smem constant byte address 0x4 - core index']
  #allocation1 [shape = 'u32[144,128]{1,0:T(1,128)}', space=vmem, size = 0x12000, scoped, tag = 'internal scratch']
  #allocation2 [shape = 'f32[2,8,32]{2,1,0:T(8,128)}', space=vmem, size = 0x2000, scoped, tag = 'scratch operand']
  #allocation3 [shape = 'f32[2,8,32]{2,1,0:T(8,128)}', space=vmem, size = 0x2000, scoped, tag = 'scratch operand']
  %s0 = inlined_call_operand.vmem [shape: f32[2,8,32], index: 0, kind: input, shape index: {}]
  %s1 = inlined_call_operand.vmem [shape: f32[2,4,8,8], index: 1, kind: input, shape index: {}]
  %s2 = inlined_call_operand.vmem [shape: f32[2,8,1], index: 2, kind: input, shape index: {}]
  %s3 = inlined_call_operand.vmem [shape: f32[1,32], index: 3, kind: input, shape index: {}]
  %s4 = inlined_call_operand.vmem [shape: f32[1,32], index: 4, kind: input, shape index: {}]
  %s5 = inlined_call_operand.vmem [shape: f32[4,32,24], index: 5, kind: input, shape index: {}]
  %s6 = inlined_call_operand.vmem [shape: f32[4,1,24], index: 6, kind: input, shape index: {}]
  %s7 = inlined_call_operand.vmem [shape: f32[4,8,32], index: 7, kind: input, shape index: {}]
  %s8 = inlined_call_operand.vmem [shape: f32[1,32], index: 8, kind: input, shape index: {}]
  %s9 = inlined_call_operand.hbm [shape: f32[2,8,32], index: 9, kind: output, shape index: {}]
  %s10 = sld [smem:[#allocation0]]
  $region115: #{tpu_custom_call.1} parent=0
    _
  %s12 = ssub.s32 1, %s10
  %s13 = scalar_select 0, %s12, %s10
  $region1: #{tpu_custom_call.1} parent=0
    #allocation4 [shape = 'u8[16384]{0}', space=vmem, size = 0x4000, scoped, tag = 'input window, operand 1']
    #allocation5 [shape = 'u8[8192]{0}', space=vmem, size = 0x2000, scoped, tag = 'output window, operand 0, single buffered']
    #allocation6 [shape = 's32[2]{0}', space=sflag, size = 0x8, scoped, tag = 'scoped memory for tpu_custom_call.1']
    %14 = vsyncpa [#allocation6], 0
    loop: start=0, step=1, limit=6
    $region2: #{tpu_custom_call.1} parent=1 // loop_pre_header
      _
    $region3: #{tpu_custom_call.1} parent=1 // loop_header
      %s16 = sphi 0, %s20
      %p17 = scmp.ge.s32.totalorder %s16, 6
      %s23 = sphi 0, %s35
      %s24 = sphi 0, %s31
      %s25 = sphi 0, %s23
      %s26 = sphi 0, %s24
      %s27 = sphi 0, %s25
      %s28 = sphi 0, %s26
      %s38 = sphi 0, %s40
      %s41 = sphi 0, %s38
      %s42 = sphi 0, %s41
      %s58 = sphi 0, %s42
      %s66 = sphi 0, %s68
      %s69 = sphi 0, %s66
      %s70 = sphi 0, %s69
      %s86 = sphi 0, %s70
      %s92 = sphi 0, %s94
      %s95 = sphi 0, %s92
      %s96 = sphi 0, %s95
      %s112 = sphi 0, %s96
      %s116 = sphi 0, %s116
      %s118 = sphi 0, %s116
      %s119 = sphi 0, %s118
      %s133 = sphi 0, %s119
      %s137 = sphi 0, %s137
      %s139 = sphi 0, %s137
      %s140 = sphi 0, %s139
      %s154 = sphi 0, %s140
      %s160 = sphi 0, %s162
      %s163 = sphi 0, %s160
      %s164 = sphi 0, %s163
      %s180 = sphi 0, %s164
      %s186 = sphi 0, %s188
      %s189 = sphi 0, %s186
      %s190 = sphi 0, %s189
      %s206 = sphi 0, %s190
      %s212 = sphi 0, %s214
      %s215 = sphi 0, %s212
      %s216 = sphi 0, %s215
      %s232 = sphi 0, %s216
      %s236 = sphi 0, %s236
      %s238 = sphi 0, %s236
      %s239 = sphi 0, %s238
      %s253 = sphi 0, %s239
      %s259 = sphi 0, %s261
      %s262 = sphi 0, %s259
      %s263 = sphi 0, %s262
      %s279 = sphi 0, %s263
    $region4: #{tpu_custom_call.1} parent=1 // loop_header_branch
      %19 = sbr.rel (%p17) target = $region8
    $region5: #{tpu_custom_call.1} parent=1 // loop_body
      %s21 = ssub.s32 %s16, 1
      %s22 = ssub.s32 %s16, 2
      %s29 = sadd.s32 1, %s24
      %p30 = scmp.ge.s32.totalorder %s29, 4
      %s31 = scalar_select %p30, 0, %s29
      %s32 = sadd.s32 1, %s23
      %s33 = scalar_select %p30, %s32, %s23
      %p34 = scmp.ge.s32.totalorder %s33, 1
      %s35 = scalar_select %p34, 0, %s33
      %s36 = ssub.s32 %s23, %s35
      %p37 = scmp.eq.s32.totalorder %s36, 0
      %s39 = sadd.s32 %s38, 1
      %s40 = scalar_select %p37, %s38, %s39
      %p43 = pneg %p37
      %p44 = scmp.eq.s32.totalorder %s16, 3
      %p45 = por %p43, %p44
      %p46 = scmp.ne.s32.totalorder %s38, %s41
      %p47 = scmp.eq.s32.totalorder %s16, 0
      %p48 = por %p46, %p47
      %p49 = scmp.ne.s32.totalorder %s38, %s41
      %p50 = scmp.eq.s32.totalorder %s21, 3
      %p51 = por %p49, %p50
      %p52 = scmp.ne.s32.totalorder %s41, %s42
      %p53 = scmp.eq.s32.totalorder %s21, 0
      %p54 = por %p52, %p53
      %p55 = scmp.ne.s32.totalorder %s41, %s42
      %p56 = scmp.eq.s32.totalorder %s22, 3
      %p57 = por %p55, %p56
      %p59 = scmp.ne.s32.totalorder %s42, %s58
      %p60 = scmp.eq.s32.totalorder %s22, 0
      %p61 = por %p59, %p60
      %s62 = ssub.s32 %s23, %s35
      %s63 = ssub.s32 %s24, %s31
      %s64 = sor.u32 %s62, %s63
      %p65 = scmp.eq.s32.totalorder %s64, 0
      %s67 = sadd.s32 %s66, 1
      %s68 = scalar_select %p65, %s66, %s67
      %p71 = pneg %p65
      %p72 = scmp.eq.s32.totalorder %s16, 3
      %p73 = por %p71, %p72
      %p74 = scmp.ne.s32.totalorder %s66, %s69
      %p75 = scmp.eq.s32.totalorder %s16, 0
      %p76 = por %p74, %p75
      %p77 = scmp.ne.s32.totalorder %s66, %s69
      %p78 = scmp.eq.s32.totalorder %s21, 3
      %p79 = por %p77, %p78
      %p80 = scmp.ne.s32.totalorder %s69, %s70
      %p81 = scmp.eq.s32.totalorder %s21, 0
      %p82 = por %p80, %p81
      %p83 = scmp.ne.s32.totalorder %s69, %s70
      %p84 = scmp.eq.s32.totalorder %s22, 3
      %p85 = por %p83, %p84
      %p87 = scmp.ne.s32.totalorder %s70, %s86
      %p88 = scmp.eq.s32.totalorder %s22, 0
      %p89 = por %p87, %p88
      %s90 = ssub.s32 %s23, %s35
      %p91 = scmp.eq.s32.totalorder %s90, 0
      %s93 = sadd.s32 %s92, 1
      %s94 = scalar_select %p91, %s92, %s93
      %p97 = pneg %p91
      %p98 = scmp.eq.s32.totalorder %s16, 3
      %p99 = por %p97, %p98
      %p100 = scmp.ne.s32.totalorder %s92, %s95
      %p101 = scmp.eq.s32.totalorder %s16, 0
      %p102 = por %p100, %p101
      %p103 = scmp.ne.s32.totalorder %s92, %s95
      %p104 = scmp.eq.s32.totalorder %s21, 3
      %p105 = por %p103, %p104
      %p106 = scmp.ne.s32.totalorder %s95, %s96
      %p107 = scmp.eq.s32.totalorder %s21, 0
      %p108 = por %p106, %p107
      %p109 = scmp.ne.s32.totalorder %s95, %s96
      %p110 = scmp.eq.s32.totalorder %s22, 3
      %p111 = por %p109, %p110
      %p113 = scmp.ne.s32.totalorder %s96, %s112
      %p114 = scmp.eq.s32.totalorder %s22, 0
      %p115 = por %p113, %p114
      %s117 = sadd.s32 %s116, 1
      %p120 = scmp.eq.s32.totalorder %s16, 3
      %p121 = scmp.ne.s32.totalorder %s116, %s118
      %p122 = scmp.eq.s32.totalorder %s16, 0
      %p123 = por %p121, %p122
      %p124 = scmp.ne.s32.totalorder %s116, %s118
      %p125 = scmp.eq.s32.totalorder %s21, 3
      %p126 = por %p124, %p125
      %p127 = scmp.ne.s32.totalorder %s118, %s119
      %p128 = scmp.eq.s32.totalorder %s21, 0
      %p129 = por %p127, %p128
      %p130 = scmp.ne.s32.totalorder %s118, %s119
      %p131 = scmp.eq.s32.totalorder %s22, 3
      %p132 = por %p130, %p131
      %p134 = scmp.ne.s32.totalorder %s119, %s133
      %p135 = scmp.eq.s32.totalorder %s22, 0
      %p136 = por %p134, %p135
      %s138 = sadd.s32 %s137, 1
      %p141 = scmp.eq.s32.totalorder %s16, 3
      %p142 = scmp.ne.s32.totalorder %s137, %s139
      %p143 = scmp.eq.s32.totalorder %s16, 0
      %p144 = por %p142, %p143
      %p145 = scmp.ne.s32.totalorder %s137, %s139
      %p146 = scmp.eq.s32.totalorder %s21, 3
      %p147 = por %p145, %p146
      %p148 = scmp.ne.s32.totalorder %s139, %s140
      %p149 = scmp.eq.s32.totalorder %s21, 0
      %p150 = por %p148, %p149
      %p151 = scmp.ne.s32.totalorder %s139, %s140
      %p152 = scmp.eq.s32.totalorder %s22, 3
      %p153 = por %p151, %p152
      %p155 = scmp.ne.s32.totalorder %s140, %s154
      %p156 = scmp.eq.s32.totalorder %s22, 0
      %p157 = por %p155, %p156
      %s158 = ssub.s32 %s24, %s31
      %p159 = scmp.eq.s32.totalorder %s158, 0
      %s161 = sadd.s32 %s160, 1
      %s162 = scalar_select %p159, %s160, %s161
      %p165 = pneg %p159
      %p166 = scmp.eq.s32.totalorder %s16, 3
      %p167 = por %p165, %p166
      %p168 = scmp.ne.s32.totalorder %s160, %s163
      %p169 = scmp.eq.s32.totalorder %s16, 0
      %p170 = por %p168, %p169
      %p171 = scmp.ne.s32.totalorder %s160, %s163
      %p172 = scmp.eq.s32.totalorder %s21, 3
      %p173 = por %p171, %p172
      %p174 = scmp.ne.s32.totalorder %s163, %s164
      %p175 = scmp.eq.s32.totalorder %s21, 0
      %p176 = por %p174, %p175
      %p177 = scmp.ne.s32.totalorder %s163, %s164
      %p178 = scmp.eq.s32.totalorder %s22, 3
      %p179 = por %p177, %p178
      %p181 = scmp.ne.s32.totalorder %s164, %s180
      %p182 = scmp.eq.s32.totalorder %s22, 0
      %p183 = por %p181, %p182
      %s184 = ssub.s32 %s24, %s31
      %p185 = scmp.eq.s32.totalorder %s184, 0
      %s187 = sadd.s32 %s186, 1
      %s188 = scalar_select %p185, %s186, %s187
      %p191 = pneg %p185
      %p192 = scmp.eq.s32.totalorder %s16, 3
      %p193 = por %p191, %p192
      %p194 = scmp.ne.s32.totalorder %s186, %s189
      %p195 = scmp.eq.s32.totalorder %s16, 0
      %p196 = por %p194, %p195
      %p197 = scmp.ne.s32.totalorder %s186, %s189
      %p198 = scmp.eq.s32.totalorder %s21, 3
      %p199 = por %p197, %p198
      %p200 = scmp.ne.s32.totalorder %s189, %s190
      %p201 = scmp.eq.s32.totalorder %s21, 0
      %p202 = por %p200, %p201
      %p203 = scmp.ne.s32.totalorder %s189, %s190
      %p204 = scmp.eq.s32.totalorder %s22, 3
      %p205 = por %p203, %p204
      %p207 = scmp.ne.s32.totalorder %s190, %s206
      %p208 = scmp.eq.s32.totalorder %s22, 0
      %p209 = por %p207, %p208
      %s210 = ssub.s32 %s24, %s31
      %p211 = scmp.eq.s32.totalorder %s210, 0
      %s213 = sadd.s32 %s212, 1
      %s214 = scalar_select %p211, %s212, %s213
      %p217 = pneg %p211
      %p218 = scmp.eq.s32.totalorder %s16, 3
      %p219 = por %p217, %p218
      %p220 = scmp.ne.s32.totalorder %s212, %s215
      %p221 = scmp.eq.s32.totalorder %s16, 0
      %p222 = por %p220, %p221
      %p223 = scmp.ne.s32.totalorder %s212, %s215
      %p224 = scmp.eq.s32.totalorder %s21, 3
      %p225 = por %p223, %p224
      %p226 = scmp.ne.s32.totalorder %s215, %s216
      %p227 = scmp.eq.s32.totalorder %s21, 0
      %p228 = por %p226, %p227
      %p229 = scmp.ne.s32.totalorder %s215, %s216
      %p230 = scmp.eq.s32.totalorder %s22, 3
      %p231 = por %p229, %p230
      %p233 = scmp.ne.s32.totalorder %s216, %s232
      %p234 = scmp.eq.s32.totalorder %s22, 0
      %p235 = por %p233, %p234
      %s237 = sadd.s32 %s236, 1
      %p240 = scmp.eq.s32.totalorder %s16, 3
      %p241 = scmp.ne.s32.totalorder %s236, %s238
      %p242 = scmp.eq.s32.totalorder %s16, 0
      %p243 = por %p241, %p242
      %p244 = scmp.ne.s32.totalorder %s236, %s238
      %p245 = scmp.eq.s32.totalorder %s21, 3
      %p246 = por %p244, %p245
      %p247 = scmp.ne.s32.totalorder %s238, %s239
      %p248 = scmp.eq.s32.totalorder %s21, 0
      %p249 = por %p247, %p248
      %p250 = scmp.ne.s32.totalorder %s238, %s239
      %p251 = scmp.eq.s32.totalorder %s22, 3
      %p252 = por %p250, %p251
      %p254 = scmp.ne.s32.totalorder %s239, %s253
      %p255 = scmp.eq.s32.totalorder %s22, 0
      %p256 = por %p254, %p255
      %s257 = ssub.s32 %s23, %s35
      %p258 = scmp.eq.s32.totalorder %s257, 0
      %s260 = sadd.s32 %s259, 1
      %s261 = scalar_select %p258, %s259, %s260
      %p264 = pneg %p258
      %p265 = scmp.eq.s32.totalorder %s16, 3
      %p266 = por %p264, %p265
      %p267 = scmp.ne.s32.totalorder %s259, %s262
      %p268 = scmp.eq.s32.totalorder %s16, 0
      %p269 = por %p267, %p268
      %p270 = scmp.ne.s32.totalorder %s259, %s262
      %p271 = scmp.eq.s32.totalorder %s21, 3
      %p272 = por %p270, %p271
      %p273 = scmp.ne.s32.totalorder %s262, %s263
      %p274 = scmp.eq.s32.totalorder %s21, 0
      %p275 = por %p273, %p274
      %p276 = scmp.ne.s32.totalorder %s262, %s263
      %p277 = scmp.eq.s32.totalorder %s22, 3
      %p278 = por %p276, %p277
      %p280 = scmp.ne.s32.totalorder %s263, %s279
      %p281 = scmp.eq.s32.totalorder %s22, 0
      %p282 = por %p280, %p281
      %p283 = scmp.le.s32.totalorder 1, %s16
      %p284 = scmp.lt.s32.totalorder %s16, 5
      %p285 = pnand %p283, %p284
      %p286 = pneg %p285
      // Predicated region
      $region9: #{tpu_custom_call.1} parent=5 // pred_check
        _
      $region10: #{tpu_custom_call.1} parent=5 // pred_check_branch
        %288 = sbr.rel (%p285) target = $region12
      $region11: #{tpu_custom_call.1} parent=5 // pred_region
        %s289 = ssub.s32 %s16, 1
        // Predicated region
        $region13: #{tpu_custom_call.1} parent=11 // pred_check
          %p290 = pneg %p54
        $region14: #{tpu_custom_call.1} parent=11 // pred_check_branch
          %292 = sbr.rel (%p290) target = $region16
        $region15: #{tpu_custom_call.1} parent=11 // pred_region
          %s293 = smul.u32 2, %s25
          %p294 = scmp.lt.s32.totalorder %s293, 1
          %s295 = scalar_select %p294, %s293, 1
          %s296 = smul.addr %s295, 8
          %s297 = scalar_lea.vmem %s0, %s296
          %s298 = smul.u32 2, %s25
        $region16: #{tpu_custom_call.1} parent=11 // pred_fallthru
          _
        // Predicated region
        $region17: #{tpu_custom_call.1} parent=11 // pred_check
          %p299 = pneg %p108
        $region18: #{tpu_custom_call.1} parent=11 // pred_check_branch
          %301 = sbr.rel (%p299) target = $region20
        $region19: #{tpu_custom_call.1} parent=11 // pred_region
          %s302 = smul.u32 2, %s25
          %p303 = scmp.lt.s32.totalorder %s302, 1
          %s304 = scalar_select %p303, %s302, 1
          %s305 = smul.addr %s304, 8
          %s306 = scalar_lea.vmem %s2, %s305
          %s307 = smul.u32 2, %s25
        $region20: #{tpu_custom_call.1} parent=11 // pred_fallthru
          _
        // Predicated region
        $region21: #{tpu_custom_call.1} parent=11 // pred_check
          %p308 = pneg %p129
        $region22: #{tpu_custom_call.1} parent=11 // pred_check_branch
          %310 = sbr.rel (%p308) target = $region24
        $region23: #{tpu_custom_call.1} parent=11 // pred_region
          _
        $region24: #{tpu_custom_call.1} parent=11 // pred_fallthru
          _
        // Predicated region
        $region25: #{tpu_custom_call.1} parent=11 // pred_check
          %p311 = pneg %p150
        $region26: #{tpu_custom_call.1} parent=11 // pred_check_branch
          %313 = sbr.rel (%p311) target = $region28
        $region27: #{tpu_custom_call.1} parent=11 // pred_region
          _
        $region28: #{tpu_custom_call.1} parent=11 // pred_fallthru
          _
        // Predicated region
        $region29: #{tpu_custom_call.1} parent=11 // pred_check
          %p314 = pneg %p249
        $region30: #{tpu_custom_call.1} parent=11 // pred_check_branch
          %316 = sbr.rel (%p314) target = $region32
        $region31: #{tpu_custom_call.1} parent=11 // pred_region
          _
        $region32: #{tpu_custom_call.1} parent=11 // pred_fallthru
          _
      $region12: #{tpu_custom_call.1} parent=5 // pred_fallthru
        _
      %p317 = scmp.lt.s32.totalorder %s16, 4
      // Predicated region
      $region33: #{tpu_custom_call.1} parent=5 // pred_check
        %p318 = pneg %p317
      $region34: #{tpu_custom_call.1} parent=5 // pred_check_branch
        %320 = sbr.rel (%p318) target = $region36
      $region35: #{tpu_custom_call.1} parent=5 // pred_region
        // Predicated region
        $region37: #{tpu_custom_call.1} parent=35 // pred_check
          %p321 = pneg %p76
        $region38: #{tpu_custom_call.1} parent=35 // pred_check_branch
          %323 = sbr.rel (%p321) target = $region40
        $region39: #{tpu_custom_call.1} parent=35 // pred_region
          %s324 = sand.u32 %s66, 1
          %s325 = sand.u32 %s66, 1
          %s326 = smul.addr %s325, 16
          %s327 = scalar_lea.vmem [#allocation4], %s326
          %s328 = smul.u32 2, %s23
          %s329 = smul.addr %s328, 4
          %s330 = sadd.s32 %s24, %s329
          %s331 = smul.addr %s330, 8
          %s332 = scalar_lea.vmem %s1, %s331
          // Predicated region
          $region41: #{tpu_custom_call.1} parent=39 // pred_check
            _
          $region42: #{tpu_custom_call.1} parent=39 // pred_check_branch
            %334 = sbr.rel (0) target = $region44
          $region43: #{tpu_custom_call.1} parent=39 // pred_region
            // Predicated region
            $region45: #{tpu_custom_call.1} parent=43 // pred_check
              _
            $region46: #{tpu_custom_call.1} parent=43 // pred_check_branch
              %336 = sbr.rel (0) target = $region48
            $region47: #{tpu_custom_call.1} parent=43 // pred_region
              // Predicated region
              $region60: #{tpu_custom_call.1} parent=47 // pred_check
                _
              $region61: #{tpu_custom_call.1} parent=47 // pred_check_branch
                %353 = sbr.rel (0) target = $region63
              $region62: #{tpu_custom_call.1} parent=47 // pred_region
                loop: start=0, step=1, limit=1
                $region64: #{tpu_custom_call.1} parent=62 // loop_pre_header
                  _
                $region65: #{tpu_custom_call.1} parent=62 // loop_header
                  %s355 = sphi 0, %s359
                  %p356 = scmp.ge.s32.totalorder %s355, 1
                  %s360 = sphi %s332, %s332
                  %s361 = sphi %s327, %s327
                $region66: #{tpu_custom_call.1} parent=62 // loop_header_branch
                  %358 = sbr.rel (%p356) target = $region70
                $region67: #{tpu_custom_call.1} parent=62 // loop_body
                  %v362 = vld [vmem:[%s360] sm:$0xff]
                  %363 = vst [vmem:[%s361] sm:$0xff] %v362
                  %v364 = vld [vmem:[%s360 + $0x20] sm:$0xff]
                  %365 = vst [vmem:[%s361 + $0x8] sm:$0xff] %v364
                $region68: #{tpu_custom_call.1} parent=62 // loop_footer
                  %s359 = sadd.s32 1, %s355
                $region69: #{tpu_custom_call.1} parent=62 // loop_footer_branch
                  %354 = sbr.rel target = $region65
                $region70: #{tpu_custom_call.1} parent=62 // loop_exit
                  _
              $region63: #{tpu_custom_call.1} parent=47 // pred_fallthru
                _
              // Predicated region
              $region71: #{tpu_custom_call.1} parent=47 // pred_check
                _
              $region72: #{tpu_custom_call.1} parent=47 // pred_check_branch
                %367 = sbr.rel target = $region74
              $region73: #{tpu_custom_call.1} parent=47 // pred_region
                _
              $region74: #{tpu_custom_call.1} parent=47 // pred_fallthru
                _
            $region48: #{tpu_custom_call.1} parent=43 // pred_fallthru
              _
            // Predicated region
            $region49: #{tpu_custom_call.1} parent=43 // pred_check
              _
            $region50: #{tpu_custom_call.1} parent=43 // pred_check_branch
              %338 = sbr.rel target = $region52
            $region51: #{tpu_custom_call.1} parent=43 // pred_region
              loop: start=0, step=1, limit=1
              $region53: #{tpu_custom_call.1} parent=51 // loop_pre_header
                _
              $region54: #{tpu_custom_call.1} parent=51 // loop_header
                %s341 = sphi 0, %s345
                %p342 = scmp.ge.s32.totalorder %s341, 1
                %s346 = sphi %s332, %s332
                %s347 = sphi %s327, %s327
              $region55: #{tpu_custom_call.1} parent=51 // loop_header_branch
                %344 = sbr.rel (%p342) target = $region59
              $region56: #{tpu_custom_call.1} parent=51 // loop_body
                %v348 = vld [vmem:[%s346] sm:$0xff]
                %349 = vst [vmem:[%s347] sm:$0xff] %v348
                %v350 = vld [vmem:[%s346 + $0x20] sm:$0xff]
                %351 = vst [vmem:[%s347 + $0x8] sm:$0xff] %v350
              $region57: #{tpu_custom_call.1} parent=51 // loop_footer
                %s345 = sadd.s32 1, %s341
              $region58: #{tpu_custom_call.1} parent=51 // loop_footer_branch
                %340 = sbr.rel target = $region54
              $region59: #{tpu_custom_call.1} parent=51 // loop_exit
                _
            $region52: #{tpu_custom_call.1} parent=43 // pred_fallthru
              _
          $region44: #{tpu_custom_call.1} parent=39 // pred_fallthru
            _
          %368 = vnop
        $region40: #{tpu_custom_call.1} parent=35 // pred_fallthru
          _
        // Predicated region
        $region75: #{tpu_custom_call.1} parent=35 // pred_check
          %p369 = pneg %p170
        $region76: #{tpu_custom_call.1} parent=35 // pred_check_branch
          %371 = sbr.rel (%p369) target = $region78
        $region77: #{tpu_custom_call.1} parent=35 // pred_region
          %p372 = scmp.lt.s32.totalorder %s24, 3
          %s373 = scalar_select %p372, %s24, 3
          %s374 = smul.addr %s373, 4
          %s375 = smul.addr %s374, 8
          %s376 = scalar_lea.vmem %s5, %s375
        $region78: #{tpu_custom_call.1} parent=35 // pred_fallthru
          _
        // Predicated region
        $region79: #{tpu_custom_call.1} parent=35 // pred_check
          %p377 = pneg %p196
        $region80: #{tpu_custom_call.1} parent=35 // pred_check_branch
          %379 = sbr.rel (%p377) target = $region82
        $region81: #{tpu_custom_call.1} parent=35 // pred_region
          %p380 = scmp.lt.s32.totalorder %s24, 3
          %s381 = scalar_select %p380, %s24, 3
          %s382 = scalar_lea.vmem %s6, %s381
        $region82: #{tpu_custom_call.1} parent=35 // pred_fallthru
          _
        // Predicated region
        $region83: #{tpu_custom_call.1} parent=35 // pred_check
          %p383 = pneg %p222
        $region84: #{tpu_custom_call.1} parent=35 // pred_check_branch
          %385 = sbr.rel (%p383) target = $region86
        $region85: #{tpu_custom_call.1} parent=35 // pred_region
          %p386 = scmp.lt.s32.totalorder %s24, 3
          %s387 = scalar_select %p386, %s24, 3
          %s388 = smul.addr %s387, 8
          %s389 = scalar_lea.vmem %s7, %s388
        $region86: #{tpu_custom_call.1} parent=35 // pred_fallthru
          _
      $region36: #{tpu_custom_call.1} parent=5 // pred_fallthru
        _
      %p390 = scmp.le.s32.totalorder 1, %s16
      %p391 = scmp.lt.s32.totalorder %s16, 5
      %p392 = pnand %p390, %p391
      %p393 = pneg %p392
      // Predicated region
      $region87: #{tpu_custom_call.1} parent=5 // pred_check
        _
      $region88: #{tpu_custom_call.1} parent=5 // pred_check_branch
        %395 = sbr.rel (%p392) target = $region90
      $region89: #{tpu_custom_call.1} parent=5 // pred_region
        %s396 = ssub.s32 %s16, 1
        %s397 = sand.u32 %s69, 1
        %s398 = sand.u32 %s69, 1
        %s399 = smul.addr %s398, 16
        %s400 = scalar_lea.vmem [#allocation4], %s399
        // Predicated region
        $region91: #{tpu_custom_call.1} parent=89 // pred_check
          %p401 = pneg %p82
        $region92: #{tpu_custom_call.1} parent=89 // pred_check_branch
          %403 = sbr.rel (%p401) target = $region94
        $region93: #{tpu_custom_call.1} parent=89 // pred_region
          _
        $region94: #{tpu_custom_call.1} parent=89 // pred_fallthru
          _
        %s404 = smul.u32 2, %s25
        %p405 = scmp.lt.s32.totalorder %s404, 1
        %s406 = scalar_select %p405, %s404, 1
        %s407 = smul.addr %s406, 8
        %s408 = scalar_lea.vmem %s0, %s407
        %p409 = pneg %p54
        %p410 = pneg %p51
        %s411 = sand.u32 %s69, 1
        %s412 = sand.u32 %s69, 1
        %s413 = smul.addr %s412, 16
        %s414 = scalar_lea.vmem [#allocation4], %s413
        %p415 = pneg %p82
        %p416 = pneg %p79
        %s417 = smul.u32 2, %s25
        %p418 = scmp.lt.s32.totalorder %s417, 1
        %s419 = scalar_select %p418, %s417, 1
        %s420 = smul.addr %s419, 8
        %s421 = scalar_lea.vmem %s2, %s420
        %p422 = pneg %p108
        %p423 = pneg %p105
        %p424 = pneg %p129
        %p425 = pneg %p126
        %p426 = pneg %p150
        %p427 = pneg %p147
        %p428 = scmp.lt.s32.totalorder %s26, 3
        %s429 = scalar_select %p428, %s26, 3
        %s430 = smul.addr %s429, 4
        %s431 = smul.addr %s430, 8
        %s432 = scalar_lea.vmem %s5, %s431
        %p433 = pneg %p176
        %p434 = pneg %p173
        %p435 = scmp.lt.s32.totalorder %s26, 3
        %s436 = scalar_select %p435, %s26, 3
        %s437 = scalar_lea.vmem %s6, %s436
        %p438 = pneg %p202
        %p439 = pneg %p199
        %p440 = scmp.lt.s32.totalorder %s26, 3
        %s441 = scalar_select %p440, %s26, 3
        %s442 = smul.addr %s441, 8
        %s443 = scalar_lea.vmem %s7, %s442
        %p444 = pneg %p228
        %p445 = pneg %p225
        %p446 = pneg %p249
        %p447 = pneg %p246
        %p448 = pneg %p275
        %p449 = pneg %p272
        %s450 = smul.u32 2, %s25
        %p451 = scmp.lt.s32.totalorder %s450, 1
        %s452 = scalar_select %p451, %s450, 1
        %s453 = smul.addr %s452, 8
        %s454 = scalar_lea.vmem %s0, %s453
        %s455 = smul.u32 2, %s25
        %s456 = smul.u32 2, %s25
        %s457 = smul.u32 2, %s25
        %p458 = scmp.lt.s32.totalorder %s457, 1
        %s459 = scalar_select %p458, %s457, 1
        %s460 = smul.addr %s459, 8
        %s461 = scalar_lea.vmem %s2, %s460
        %s462 = smul.u32 2, %s25
        %p463 = scmp.lt.s32.totalorder %s26, 3
        %s464 = scalar_select %p463, %s26, 3
        %s465 = smul.addr %s464, 4
        %s466 = smul.addr %s465, 8
        %s467 = scalar_lea.vmem %s5, %s466
        %p468 = scmp.lt.s32.totalorder %s26, 3
        %s469 = scalar_select %p468, %s26, 3
        %s470 = scalar_lea.vmem %s6, %s469
        %p471 = scmp.lt.s32.totalorder %s26, 3
        %s472 = scalar_select %p471, %s26, 3
        %s473 = smul.addr %s472, 8
        %s474 = scalar_lea.vmem %s7, %s473
        %s475 = smul.u32 2, %s25
        %p476 = scmp.eq.s32.totalorder %s26, 0
        // Predicated region
        $region95: #{tpu_custom_call.1} parent=89 // pred_check
          %p477 = pneg %p476
        $region96: #{tpu_custom_call.1} parent=89 // pred_check_branch
          %479 = sbr.rel (%p477) target = $region98
        $region97: #{tpu_custom_call.1} parent=89 // pred_region
          %v480 = vld [vmem:[%s454] sm:$0xff]
          %v481 = vld [vmem:[%s454 + $0x8] sm:$0xff]
          %vm482 = vcmask 261120
          %v483 = vsel %vm482, %v480, 0.0
          %484 = vadd.xlane.f32.xlu0 %v483
          %v485 = vpop.xlane.xlu0 %484
          %v486 = vsel %vm482, %v481, 0.0
          %487 = vadd.xlane.f32.xlu0 %v486
          %v488 = vpop.xlane.xlu0 %487
          %v489 = vrcp.pop 32.0
          %v490 = vmul.f32 %v485, %v489
          %v491 = vmul.f32 %v488, %v489
          %v492 = vsub.f32 %v480, %v490
          %v493 = vsub.f32 %v481, %v491
          %v494 = vmul.f32 %v492, %v492
          %v495 = vmul.f32 %v493, %v493
          %v496 = vsel %vm482, %v494, 0.0
          %497 = vadd.xlane.f32.xlu0 %v496
          %v498 = vpop.xlane.xlu0 %497
          %v499 = vsel %vm482, %v495, 0.0
          %500 = vadd.xlane.f32.xlu0 %v499
          %v501 = vpop.xlane.xlu0 %500
          %v502 = vmul.f32 %v498, %v489
          %v503 = vmul.f32 %v501, %v489
          %v504 = vadd.f32 %v502, 1e-05
          %v505 = vadd.f32 %v503, 1e-05
          %v506 = vrsqrt.pop %v504
          %v507 = vrsqrt.pop %v505
          %v508 = vmul.f32 %v492, %v506
          %v509 = vmul.f32 %v493, %v507
          %v510 = vld [vmem:[%s3] sm:$0x1]
          %v512 = vlaneseq
          %v513 = vshrl.u32 %v512, 7
          %v514 = vsub.s32 0, %v513
          %v515 = vrot.slane %v510, %v514
          %v517 = vmul.f32 %v508, %v515
          %v518 = vmul.f32 %v509, %v515
          %v519 = vld [vmem:[%s4] sm:$0x1]
          %v521 = vlaneseq
          %v522 = vshrl.u32 %v521, 7
          %v523 = vsub.s32 0, %v522
          %v524 = vrot.slane %v519, %v523
          %v526 = vadd.f32 %v517, %v524
          %v527 = vadd.f32 %v518, %v524
          %528 = vst.msk [vmem:[#allocation2] sm:$0xff] %vm482, %v526
          %529 = vst.msk [vmem:[#allocation2 + $0x8] sm:$0xff] %vm482, %v527
          %530 = vst.msk [vmem:[#allocation3] sm:$0xff] %vm482, 0.0
          %531 = vst.msk [vmem:[#allocation3 + $0x8] sm:$0xff] %vm482, 0.0
        $region98: #{tpu_custom_call.1} parent=89 // pred_fallthru
          _
        %v532 = vld [vmem:[%s467] sm:$0xff]
        %v533 = vld [vmem:[%s467 + $0x8] sm:$0xff]
        %v534 = vld [vmem:[%s467 + $0x10] sm:$0xff]
        %v535 = vld [vmem:[%s467 + $0x18] sm:$0xff]
        %v536 = vld [vmem:[%s470] sm:$0x1]
        %v537 = vld [vmem:[%s474] sm:$0xff]
        %v538 = vld [vmem:[#allocation2] sm:$0xff]
        %v540 = vlaneseq
        %v541 = vshrl.u32 %v540, 7
        %v542 = vsub.s32 0, %v541
        %v543 = vrot.slane %v536, %v542
        %vm545 = vcmask 261120
        %v547 = vsel %vm545, %v538, 0
        %549 = vmatprep.subr.mxu0 0.0
        %550 = vmatpush1.msra.mxu0 %v532
        %551 = vmatprep.subr.mxu0 0.0
        %552 = vmatpush1.msra.mxu0 %v533
        %553 = vmatprep.subr.mxu0 0.0
        %554 = vmatpush1.msra.mxu0 %v534
        %555 = vmatprep.subr.mxu0 0.0
        %556 = vmatpush1.msra.mxu0 %v535
        %557 = vmatprep.subr.mxu0 0.0
        %558 = vmatpush1.msra.mxu0 0.0
        %559 = vmatprep.subr.mxu0 0.0
        %560 = vmatpush1.msra.mxu0 0.0
        %561 = vmatprep.subr.mxu0 0.0
        %562 = vmatpush1.msra.mxu0 0.0
        %563 = vmatprep.subr.mxu0 0.0
        %564 = vmatpush1.msra.mxu0 0.0
        %565 = vmatprep.subr.mxu0 0.0
        %566 = vmatpush1.msra.mxu0 0.0
        %567 = vmatprep.subr.mxu0 0.0
        %568 = vmatpush1.msra.mxu0 0.0
        %569 = vmatprep.subr.mxu0 0.0
        %570 = vmatpush1.msra.mxu0 0.0
        %571 = vmatprep.subr.mxu0 0.0
        %572 = vmatpush1.msra.mxu0 0.0
        %573 = vmatprep.subr.mxu0 0.0
        %574 = vmatpush1.msra.mxu0 0.0
        %575 = vmatprep.subr.mxu0 0.0
        %576 = vmatpush1.msra.mxu0 0.0
        %577 = vmatprep.subr.mxu0 0.0
        %578 = vmatpush1.msra.mxu0 0.0
        %579 = vmatprep.subr.mxu0 0.0
        %580 = vmatpush1.msra.mxu0 0.0
        %581 = vmatprep.subr.mxu0 0.0
        %582 = vmatpush1.msra.mxu0 0.0
        %583 = vmatprep.subr.mxu0 0.0
        %584 = vmatpush1.msra.mxu0 0.0
        %585 = vmatprep.subr.mxu0 0.0
        %586 = vmatpush1.msra.mxu0 0.0
        %587 = vmatprep.subr.mxu0 0.0
        %588 = vmatpush1.msra.mxu0 0.0
        %589 = vmatprep.subr.mxu0 0.0
        %590 = vmatpush1.msra.mxu0 0.0
        %591 = vmatprep.subr.mxu0 0.0
        %592 = vmatpush1.msra.mxu0 0.0
        %593 = vmatprep.subr.mxu0 0.0
        %594 = vmatpush1.msra.mxu0 0.0
        %595 = vmatprep.subr.mxu0 0.0
        %596 = vmatpush1.msra.mxu0 0.0
        %597 = vmatprep.subr.mxu0 0.0
        %598 = vmatpush1.msra.mxu0 0.0
        %599 = vmatprep.subr.mxu0 0.0
        %600 = vmatpush1.msra.mxu0 0.0
        %601 = vmatprep.subr.mxu0 0.0
        %602 = vmatpush1.msra.mxu0 0.0
        %603 = vmatprep.subr.mxu0 0.0
        %604 = vmatpush1.msra.mxu0 0.0
        %605 = vmatprep.subr.mxu0 0.0
        %606 = vmatpush1.msra.mxu0 0.0
        %607 = vmatprep.subr.mxu0 0.0
        %608 = vmatpush1.msra.mxu0 0.0
        %609 = vmatprep.subr.mxu0 0.0
        %610 = vmatpush1.msra.mxu0 0.0
        %611 = vmatprep.subr.mxu0 0.0
        %612 = vmatpush1.msra.mxu0 0.0
        %613 = vmatprep.mubr.f32.mxu0 0.0
        %614 = vmatmul.mubr.f32.gmra.mrb[0].mxu0 %v547
        %v615 = vpop.f32.mrb[0].mxu0
        %v616 = vadd.f32 %v543, %v615
        %v617 = vpop.f32.mrb[0].mxu0
        %618 = vdwg.mxu0
        %v619 = vld [vmem:[%s461] sm:$0xff]
        %621 = vset.pattern.permute.xlu0 0
        %622 = vperm.xlu0 %621, %v619
        %v623 = vpop.permute.xlu0 %622
        %v625 = vmul.f32 %v616, %v623
        %v626 = vld [vmem:[%s400] sm:$0xff]
        %628 = vrot.lane.b32.xlu0 %v616, 120
        %v629 = vpop.permute.xlu0 %628
        %vm630 = vcmask 64512
        %v631 = vsel %vm630, %v616, 0
        %v633 = vsel %vm630, %v629, 0
        %635 = vmatprep.subr.mxu0 0.0
        %636 = vmatpush1.xpose.msra.mxu0 %v633
        %637 = vmatprep.subr.mxu0 0.0
        %638 = vmatpush1.xpose.msra.mxu0 0.0
        %639 = vmatprep.subr.mxu0 0.0
        %640 = vmatpush1.xpose.msra.mxu0 0.0
        %641 = vmatprep.subr.mxu0 0.0
        %642 = vmatpush1.xpose.msra.mxu0 0.0
        %643 = vmatprep.subr.mxu0 0.0
        %644 = vmatpush1.xpose.msra.mxu0 0.0
        %645 = vmatprep.subr.mxu0 0.0
        %646 = vmatpush1.xpose.msra.mxu0 0.0
        %647 = vmatprep.subr.mxu0 0.0
        %648 = vmatpush1.xpose.msra.mxu0 0.0
        %649 = vmatprep.subr.mxu0 0.0
        %650 = vmatpush1.xpose.msra.mxu0 0.0
        %651 = vmatprep.subr.mxu0 0.0
        %652 = vmatpush1.xpose.msra.mxu0 0.0
        %653 = vmatprep.subr.mxu0 0.0
        %654 = vmatpush1.xpose.msra.mxu0 0.0
        %655 = vmatprep.subr.mxu0 0.0
        %656 = vmatpush1.xpose.msra.mxu0 0.0
        %657 = vmatprep.subr.mxu0 0.0
        %658 = vmatpush1.xpose.msra.mxu0 0.0
        %659 = vmatprep.subr.mxu0 0.0
        %660 = vmatpush1.xpose.msra.mxu0 0.0
        %661 = vmatprep.subr.mxu0 0.0
        %662 = vmatpush1.xpose.msra.mxu0 0.0
        %663 = vmatprep.subr.mxu0 0.0
        %664 = vmatpush1.xpose.msra.mxu0 0.0
        %665 = vmatprep.subr.mxu0 0.0
        %666 = vmatpush1.xpose.msra.mxu0 0.0
        %667 = vmatprep.subr.mxu0 0.0
        %668 = vmatpush1.xpose.msra.mxu0 0.0
        %669 = vmatprep.subr.mxu0 0.0
        %670 = vmatpush1.xpose.msra.mxu0 0.0
        %671 = vmatprep.subr.mxu0 0.0
        %672 = vmatpush1.xpose.msra.mxu0 0.0
        %673 = vmatprep.subr.mxu0 0.0
        %674 = vmatpush1.xpose.msra.mxu0 0.0
        %675 = vmatprep.subr.mxu0 0.0
        %676 = vmatpush1.xpose.msra.mxu0 0.0
        %677 = vmatprep.subr.mxu0 0.0
        %678 = vmatpush1.xpose.msra.mxu0 0.0
        %679 = vmatprep.subr.mxu0 0.0
        %680 = vmatpush1.xpose.msra.mxu0 0.0
        %681 = vmatprep.subr.mxu0 0.0
        %682 = vmatpush1.xpose.msra.mxu0 0.0
        %683 = vmatprep.subr.mxu0 0.0
        %684 = vmatpush1.xpose.msra.mxu0 0.0
        %685 = vmatprep.subr.mxu0 0.0
        %686 = vmatpush1.xpose.msra.mxu0 0.0
        %687 = vmatprep.subr.mxu0 0.0
        %688 = vmatpush1.xpose.msra.mxu0 0.0
        %689 = vmatprep.subr.mxu0 0.0
        %690 = vmatpush1.xpose.msra.mxu0 0.0
        %691 = vmatprep.subr.mxu0 0.0
        %692 = vmatpush1.xpose.msra.mxu0 0.0
        %693 = vmatprep.subr.mxu0 0.0
        %694 = vmatpush1.xpose.msra.mxu0 0.0
        %695 = vmatprep.subr.mxu0 0.0
        %696 = vmatpush1.xpose.msra.mxu0 0.0
        %697 = vmatprep.subr.mxu0 0.0
        %698 = vmatpush1.xpose.msra.mxu0 0.0
        %699 = vmatprep.mubr.f32.mxu0 0.0
        %700 = vmatmul.mubr.f32.gmra.mrb[0].mxu0 %v631
        %v701 = vpop.f32.mrb[0].mxu0
        %v702 = vadd.f32 %v626, %v701
        %v703 = vpop.f32.mrb[0].mxu0
        %704 = vdwg.mxu0
        %v705 = vsel %vm630, %v702, -inf
        %706 = vmax.xlane.f32.xlu0 %v705
        %v707 = vpop.xlane.xlu0 %706
        %v708 = vsub.f32 %v702, %v707
        %v709 = vmul.f32 %v708, 1.442695
        %v710 = vpow.pop %v709
        %v711 = vsel %vm630, %v710, 0.0
        %712 = vadd.xlane.f32.xlu0 %v711
        %v713 = vpop.xlane.xlu0 %712
        %715 = vrot.lane.b32.xlu0 %v625, 112
        %v716 = vpop.permute.xlu0 %715
        %v719 = vsel %vm630, %v710, 0
        %721 = vmatprep.subr.mxu0 0.0
        %722 = vmatpush1.msra.mxu0 %v716
        %723 = vmatprep.subr.mxu0 0.0
        %724 = vmatpush1.msra.mxu0 0.0
        %725 = vmatprep.subr.mxu0 0.0
        %726 = vmatpush1.msra.mxu0 0.0
        %727 = vmatprep.subr.mxu0 0.0
        %728 = vmatpush1.msra.mxu0 0.0
        %729 = vmatprep.subr.mxu0 0.0
        %730 = vmatpush1.msra.mxu0 0.0
        %731 = vmatprep.subr.mxu0 0.0
        %732 = vmatpush1.msra.mxu0 0.0
        %733 = vmatprep.subr.mxu0 0.0
        %734 = vmatpush1.msra.mxu0 0.0
        %735 = vmatprep.subr.mxu0 0.0
        %736 = vmatpush1.msra.mxu0 0.0
        %737 = vmatprep.subr.mxu0 0.0
        %738 = vmatpush1.msra.mxu0 0.0
        %739 = vmatprep.subr.mxu0 0.0
        %740 = vmatpush1.msra.mxu0 0.0
        %741 = vmatprep.subr.mxu0 0.0
        %742 = vmatpush1.msra.mxu0 0.0
        %743 = vmatprep.subr.mxu0 0.0
        %744 = vmatpush1.msra.mxu0 0.0
        %745 = vmatprep.subr.mxu0 0.0
        %746 = vmatpush1.msra.mxu0 0.0
        %747 = vmatprep.subr.mxu0 0.0
        %748 = vmatpush1.msra.mxu0 0.0
        %749 = vmatprep.subr.mxu0 0.0
        %750 = vmatpush1.msra.mxu0 0.0
        %751 = vmatprep.subr.mxu0 0.0
        %752 = vmatpush1.msra.mxu0 0.0
        %753 = vmatprep.subr.mxu0 0.0
        %754 = vmatpush1.msra.mxu0 0.0
        %755 = vmatprep.subr.mxu0 0.0
        %756 = vmatpush1.msra.mxu0 0.0
        %757 = vmatprep.subr.mxu0 0.0
        %758 = vmatpush1.msra.mxu0 0.0
        %759 = vmatprep.subr.mxu0 0.0
        %760 = vmatpush1.msra.mxu0 0.0
        %761 = vmatprep.subr.mxu0 0.0
        %762 = vmatpush1.msra.mxu0 0.0
        %763 = vmatprep.subr.mxu0 0.0
        %764 = vmatpush1.msra.mxu0 0.0
        %765 = vmatprep.subr.mxu0 0.0
        %766 = vmatpush1.msra.mxu0 0.0
        %767 = vmatprep.subr.mxu0 0.0
        %768 = vmatpush1.msra.mxu0 0.0
        %769 = vmatprep.subr.mxu0 0.0
        %770 = vmatpush1.msra.mxu0 0.0
        %771 = vmatprep.subr.mxu0 0.0
        %772 = vmatpush1.msra.mxu0 0.0
        %773 = vmatprep.subr.mxu0 0.0
        %774 = vmatpush1.msra.mxu0 0.0
        %775 = vmatprep.subr.mxu0 0.0
        %776 = vmatpush1.msra.mxu0 0.0
        %777 = vmatprep.subr.mxu0 0.0
        %778 = vmatpush1.msra.mxu0 0.0
        %779 = vmatprep.subr.mxu0 0.0
        %780 = vmatpush1.msra.mxu0 0.0
        %781 = vmatprep.subr.mxu0 0.0
        %782 = vmatpush1.msra.mxu0 0.0
        %783 = vmatprep.subr.mxu0 0.0
        %784 = vmatpush1.msra.mxu0 0.0
        %785 = vmatprep.mubr.f32.mxu0 0.0
        %786 = vmatmul.mubr.f32.gmra.mrb[0].mxu0 %v719
        %v787 = vpop.f32.mrb[0].mxu0
        %v788 = vadd.f32 0.0, %v787
        %v789 = vpop.f32.mrb[0].mxu0
        %790 = vdwg.mxu0
        %v791 = vrcp.pop %v713
        %v792 = vmul.f32 %v788, %v791
        %v793 = vld [vmem:[#allocation3] sm:$0xff]
        %v795 = vsel %vm630, %v792, 0
        %797 = vmatprep.subr.mxu0 0.0
        %798 = vmatpush1.msra.mxu0 %v537
        %799 = vmatprep.subr.mxu0 0.0
        %800 = vmatpush1.msra.mxu0 0.0
        %801 = vmatprep.subr.mxu0 0.0
        %802 = vmatpush1.msra.mxu0 0.0
        %803 = vmatprep.subr.mxu0 0.0
        %804 = vmatpush1.msra.mxu0 0.0
        %805 = vmatprep.subr.mxu0 0.0
        %806 = vmatpush1.msra.mxu0 0.0
        %807 = vmatprep.subr.mxu0 0.0
        %808 = vmatpush1.msra.mxu0 0.0
        %809 = vmatprep.subr.mxu0 0.0
        %810 = vmatpush1.msra.mxu0 0.0
        %811 = vmatprep.subr.mxu0 0.0
        %812 = vmatpush1.msra.mxu0 0.0
        %813 = vmatprep.subr.mxu0 0.0
        %814 = vmatpush1.msra.mxu0 0.0
        %815 = vmatprep.subr.mxu0 0.0
        %816 = vmatpush1.msra.mxu0 0.0
        %817 = vmatprep.subr.mxu0 0.0
        %818 = vmatpush1.msra.mxu0 0.0
        %819 = vmatprep.subr.mxu0 0.0
        %820 = vmatpush1.msra.mxu0 0.0
        %821 = vmatprep.subr.mxu0 0.0
        %822 = vmatpush1.msra.mxu0 0.0
        %823 = vmatprep.subr.mxu0 0.0
        %824 = vmatpush1.msra.mxu0 0.0
        %825 = vmatprep.subr.mxu0 0.0
        %826 = vmatpush1.msra.mxu0 0.0
        %827 = vmatprep.subr.mxu0 0.0
        %828 = vmatpush1.msra.mxu0 0.0
        %829 = vmatprep.subr.mxu0 0.0
        %830 = vmatpush1.msra.mxu0 0.0
        %831 = vmatprep.subr.mxu0 0.0
        %832 = vmatpush1.msra.mxu0 0.0
        %833 = vmatprep.subr.mxu0 0.0
        %834 = vmatpush1.msra.mxu0 0.0
        %835 = vmatprep.subr.mxu0 0.0
        %836 = vmatpush1.msra.mxu0 0.0
        %837 = vmatprep.subr.mxu0 0.0
        %838 = vmatpush1.msra.mxu0 0.0
        %839 = vmatprep.subr.mxu0 0.0
        %840 = vmatpush1.msra.mxu0 0.0
        %841 = vmatprep.subr.mxu0 0.0
        %842 = vmatpush1.msra.mxu0 0.0
        %843 = vmatprep.subr.mxu0 0.0
        %844 = vmatpush1.msra.mxu0 0.0
        %845 = vmatprep.subr.mxu0 0.0
        %846 = vmatpush1.msra.mxu0 0.0
        %847 = vmatprep.subr.mxu0 0.0
        %848 = vmatpush1.msra.mxu0 0.0
        %849 = vmatprep.subr.mxu0 0.0
        %850 = vmatpush1.msra.mxu0 0.0
        %851 = vmatprep.subr.mxu0 0.0
        %852 = vmatpush1.msra.mxu0 0.0
        %853 = vmatprep.subr.mxu0 0.0
        %854 = vmatpush1.msra.mxu0 0.0
        %855 = vmatprep.subr.mxu0 0.0
        %856 = vmatpush1.msra.mxu0 0.0
        %857 = vmatprep.subr.mxu0 0.0
        %858 = vmatpush1.msra.mxu0 0.0
        %859 = vmatprep.subr.mxu0 0.0
        %860 = vmatpush1.msra.mxu0 0.0
        %861 = vmatprep.mubr.f32.mxu0 0.0
        %862 = vmatmul.mubr.f32.gmra.mrb[0].mxu0 %v795
        %v863 = vpop.f32.mrb[0].mxu0
        %v864 = vadd.f32 0.0, %v863
        %v865 = vpop.f32.mrb[0].mxu0
        %866 = vdwg.mxu0
        %v867 = vadd.f32 %v793, %v864
        %868 = vst.msk [vmem:[#allocation3] sm:$0xff] %vm545, %v867
        %s869 = scalar_lea.vmem [#allocation2], 8
        %v870 = vld [vmem:[%s869] sm:$0xff]
        %v872 = vsel %vm545, %v870, 0
        %874 = vmatprep.subr.mxu0 0.0
        %875 = vmatpush1.msra.mxu0 %v532
        %876 = vmatprep.subr.mxu0 0.0
        %877 = vmatpush1.msra.mxu0 %v533
        %878 = vmatprep.subr.mxu0 0.0
        %879 = vmatpush1.msra.mxu0 %v534
        %880 = vmatprep.subr.mxu0 0.0
        %881 = vmatpush1.msra.mxu0 %v535
        %882 = vmatprep.subr.mxu0 0.0
        %883 = vmatpush1.msra.mxu0 0.0
        %884 = vmatprep.subr.mxu0 0.0
        %885 = vmatpush1.msra.mxu0 0.0
        %886 = vmatprep.subr.mxu0 0.0
        %887 = vmatpush1.msra.mxu0 0.0
        %888 = vmatprep.subr.mxu0 0.0
        %889 = vmatpush1.msra.mxu0 0.0
        %890 = vmatprep.subr.mxu0 0.0
        %891 = vmatpush1.msra.mxu0 0.0
        %892 = vmatprep.subr.mxu0 0.0
        %893 = vmatpush1.msra.mxu0 0.0
        %894 = vmatprep.subr.mxu0 0.0
        %895 = vmatpush1.msra.mxu0 0.0
        %896 = vmatprep.subr.mxu0 0.0
        %897 = vmatpush1.msra.mxu0 0.0
        %898 = vmatprep.subr.mxu0 0.0
        %899 = vmatpush1.msra.mxu0 0.0
        %900 = vmatprep.subr.mxu0 0.0
        %901 = vmatpush1.msra.mxu0 0.0
        %902 = vmatprep.subr.mxu0 0.0
        %903 = vmatpush1.msra.mxu0 0.0
        %904 = vmatprep.subr.mxu0 0.0
        %905 = vmatpush1.msra.mxu0 0.0
        %906 = vmatprep.subr.mxu0 0.0
        %907 = vmatpush1.msra.mxu0 0.0
        %908 = vmatprep.subr.mxu0 0.0
        %909 = vmatpush1.msra.mxu0 0.0
        %910 = vmatprep.subr.mxu0 0.0
        %911 = vmatpush1.msra.mxu0 0.0
        %912 = vmatprep.subr.mxu0 0.0
        %913 = vmatpush1.msra.mxu0 0.0
        %914 = vmatprep.subr.mxu0 0.0
        %915 = vmatpush1.msra.mxu0 0.0
        %916 = vmatprep.subr.mxu0 0.0
        %917 = vmatpush1.msra.mxu0 0.0
        %918 = vmatprep.subr.mxu0 0.0
        %919 = vmatpush1.msra.mxu0 0.0
        %920 = vmatprep.subr.mxu0 0.0
        %921 = vmatpush1.msra.mxu0 0.0
        %922 = vmatprep.subr.mxu0 0.0
        %923 = vmatpush1.msra.mxu0 0.0
        %924 = vmatprep.subr.mxu0 0.0
        %925 = vmatpush1.msra.mxu0 0.0
        %926 = vmatprep.subr.mxu0 0.0
        %927 = vmatpush1.msra.mxu0 0.0
        %928 = vmatprep.subr.mxu0 0.0
        %929 = vmatpush1.msra.mxu0 0.0
        %930 = vmatprep.subr.mxu0 0.0
        %931 = vmatpush1.msra.mxu0 0.0
        %932 = vmatprep.subr.mxu0 0.0
        %933 = vmatpush1.msra.mxu0 0.0
        %934 = vmatprep.subr.mxu0 0.0
        %935 = vmatpush1.msra.mxu0 0.0
        %936 = vmatprep.subr.mxu0 0.0
        %937 = vmatpush1.msra.mxu0 0.0
        %938 = vmatprep.mubr.f32.mxu0 0.0
        %939 = vmatmul.mubr.f32.gmra.mrb[0].mxu0 %v872
        %v940 = vpop.f32.mrb[0].mxu0
        %v941 = vadd.f32 %v543, %v940
        %v942 = vpop.f32.mrb[0].mxu0
        %943 = vdwg.mxu0
        %s944 = scalar_lea.vmem %s461, 8
        %v945 = vld [vmem:[%s944] sm:$0xff]
        %947 = vset.pattern.permute.xlu0 0
        %948 = vperm.xlu0 %947, %v945
        %v949 = vpop.permute.xlu0 %948
        %v951 = vmul.f32 %v941, %v949
        %s952 = scalar_lea.vmem %s400, 8 [#allocation4]
        %v953 = vld [vmem:[%s952] sm:$0xff]
        %955 = vrot.lane.b32.xlu0 %v941, 120
        %v956 = vpop.permute.xlu0 %955
        %v957 = vsel %vm630, %v941, 0
        %v959 = vsel %vm630, %v956, 0
        %961 = vmatprep.subr.mxu0 0.0
        %962 = vmatpush1.xpose.msra.mxu0 %v959
        %963 = vmatprep.subr.mxu0 0.0
        %964 = vmatpush1.xpose.msra.mxu0 0.0
        %965 = vmatprep.subr.mxu0 0.0
        %966 = vmatpush1.xpose.msra.mxu0 0.0
        %967 = vmatprep.subr.mxu0 0.0
        %968 = vmatpush1.xpose.msra.mxu0 0.0
        %969 = vmatprep.subr.mxu0 0.0
        %970 = vmatpush1.xpose.msra.mxu0 0.0
        %971 = vmatprep.subr.mxu0 0.0
        %972 = vmatpush1.xpose.msra.mxu0 0.0
        %973 = vmatprep.subr.mxu0 0.0
        %974 = vmatpush1.xpose.msra.mxu0 0.0
        %975 = vmatprep.subr.mxu0 0.0
        %976 = vmatpush1.xpose.msra.mxu0 0.0
        %977 = vmatprep.subr.mxu0 0.0
        %978 = vmatpush1.xpose.msra.mxu0 0.0
        %979 = vmatprep.subr.mxu0 0.0
        %980 = vmatpush1.xpose.msra.mxu0 0.0
        %981 = vmatprep.subr.mxu0 0.0
        %982 = vmatpush1.xpose.msra.mxu0 0.0
        %983 = vmatprep.subr.mxu0 0.0
        %984 = vmatpush1.xpose.msra.mxu0 0.0
        %985 = vmatprep.subr.mxu0 0.0
        %986 = vmatpush1.xpose.msra.mxu0 0.0
        %987 = vmatprep.subr.mxu0 0.0
        %988 = vmatpush1.xpose.msra.mxu0 0.0
        %989 = vmatprep.subr.mxu0 0.0
        %990 = vmatpush1.xpose.msra.mxu0 0.0
        %991 = vmatprep.subr.mxu0 0.0
        %992 = vmatpush1.xpose.msra.mxu0 0.0
        %993 = vmatprep.subr.mxu0 0.0
        %994 = vmatpush1.xpose.msra.mxu0 0.0
        %995 = vmatprep.subr.mxu0 0.0
        %996 = vmatpush1.xpose.msra.mxu0 0.0
        %997 = vmatprep.subr.mxu0 0.0
        %998 = vmatpush1.xpose.msra.mxu0 0.0
        %999 = vmatprep.subr.mxu0 0.0
        %1000 = vmatpush1.xpose.msra.mxu0 0.0
        %1001 = vmatprep.subr.mxu0 0.0
        %1002 = vmatpush1.xpose.msra.mxu0 0.0
        %1003 = vmatprep.subr.mxu0 0.0
        %1004 = vmatpush1.xpose.msra.mxu0 0.0
        %1005 = vmatprep.subr.mxu0 0.0
        %1006 = vmatpush1.xpose.msra.mxu0 0.0
        %1007 = vmatprep.subr.mxu0 0.0
        %1008 = vmatpush1.xpose.msra.mxu0 0.0
        %1009 = vmatprep.subr.mxu0 0.0
        %1010 = vmatpush1.xpose.msra.mxu0 0.0
        %1011 = vmatprep.subr.mxu0 0.0
        %1012 = vmatpush1.xpose.msra.mxu0 0.0
        %1013 = vmatprep.subr.mxu0 0.0
        %1014 = vmatpush1.xpose.msra.mxu0 0.0
        %1015 = vmatprep.subr.mxu0 0.0
        %1016 = vmatpush1.xpose.msra.mxu0 0.0
        %1017 = vmatprep.subr.mxu0 0.0
        %1018 = vmatpush1.xpose.msra.mxu0 0.0
        %1019 = vmatprep.subr.mxu0 0.0
        %1020 = vmatpush1.xpose.msra.mxu0 0.0
        %1021 = vmatprep.subr.mxu0 0.0
        %1022 = vmatpush1.xpose.msra.mxu0 0.0
        %1023 = vmatprep.subr.mxu0 0.0
        %1024 = vmatpush1.xpose.msra.mxu0 0.0
        %1025 = vmatprep.mubr.f32.mxu0 0.0
        %1026 = vmatmul.mubr.f32.gmra.mrb[0].mxu0 %v957
        %v1027 = vpop.f32.mrb[0].mxu0
        %v1028 = vadd.f32 %v953, %v1027
        %v1029 = vpop.f32.mrb[0].mxu0
        %1030 = vdwg.mxu0
        %v1031 = vsel %vm630, %v1028, -inf
        %1032 = vmax.xlane.f32.xlu0 %v1031
        %v1033 = vpop.xlane.xlu0 %1032
        %v1034 = vsub.f32 %v1028, %v1033
        %v1035 = vmul.f32 %v1034, 1.442695
        %v1036 = vpow.pop %v1035
        %v1037 = vsel %vm630, %v1036, 0.0
        %1038 = vadd.xlane.f32.xlu0 %v1037
        %v1039 = vpop.xlane.xlu0 %1038
        %1041 = vrot.lane.b32.xlu0 %v951, 112
        %v1042 = vpop.permute.xlu0 %1041
        %v1045 = vsel %vm630, %v1036, 0
        %1047 = vmatprep.subr.mxu0 0.0
        %1048 = vmatpush1.msra.mxu0 %v1042
        %1049 = vmatprep.subr.mxu0 0.0
        %1050 = vmatpush1.msra.mxu0 0.0
        %1051 = vmatprep.subr.mxu0 0.0
        %1052 = vmatpush1.msra.mxu0 0.0
        %1053 = vmatprep.subr.mxu0 0.0
        %1054 = vmatpush1.msra.mxu0 0.0
        %1055 = vmatprep.subr.mxu0 0.0
        %1056 = vmatpush1.msra.mxu0 0.0
        %1057 = vmatprep.subr.mxu0 0.0
        %1058 = vmatpush1.msra.mxu0 0.0
        %1059 = vmatprep.subr.mxu0 0.0
        %1060 = vmatpush1.msra.mxu0 0.0
        %1061 = vmatprep.subr.mxu0 0.0
        %1062 = vmatpush1.msra.mxu0 0.0
        %1063 = vmatprep.subr.mxu0 0.0
        %1064 = vmatpush1.msra.mxu0 0.0
        %1065 = vmatprep.subr.mxu0 0.0
        %1066 = vmatpush1.msra.mxu0 0.0
        %1067 = vmatprep.subr.mxu0 0.0
        %1068 = vmatpush1.msra.mxu0 0.0
        %1069 = vmatprep.subr.mxu0 0.0
        %1070 = vmatpush1.msra.mxu0 0.0
        %1071 = vmatprep.subr.mxu0 0.0
        %1072 = vmatpush1.msra.mxu0 0.0
        %1073 = vmatprep.subr.mxu0 0.0
        %1074 = vmatpush1.msra.mxu0 0.0
        %1075 = vmatprep.subr.mxu0 0.0
        %1076 = vmatpush1.msra.mxu0 0.0
        %1077 = vmatprep.subr.mxu0 0.0
        %1078 = vmatpush1.msra.mxu0 0.0
        %1079 = vmatprep.subr.mxu0 0.0
        %1080 = vmatpush1.msra.mxu0 0.0
        %1081 = vmatprep.subr.mxu0 0.0
        %1082 = vmatpush1.msra.mxu0 0.0
        %1083 = vmatprep.subr.mxu0 0.0
        %1084 = vmatpush1.msra.mxu0 0.0
        %1085 = vmatprep.subr.mxu0 0.0
        %1086 = vmatpush1.msra.mxu0 0.0
        %1087 = vmatprep.subr.mxu0 0.0
        %1088 = vmatpush1.msra.mxu0 0.0
        %1089 = vmatprep.subr.mxu0 0.0
        %1090 = vmatpush1.msra.mxu0 0.0
        %1091 = vmatprep.subr.mxu0 0.0
        %1092 = vmatpush1.msra.mxu0 0.0
        %1093 = vmatprep.subr.mxu0 0.0
        %1094 = vmatpush1.msra.mxu0 0.0
        %1095 = vmatprep.subr.mxu0 0.0
        %1096 = vmatpush1.msra.mxu0 0.0
        %1097 = vmatprep.subr.mxu0 0.0
        %1098 = vmatpush1.msra.mxu0 0.0
        %1099 = vmatprep.subr.mxu0 0.0
        %1100 = vmatpush1.msra.mxu0 0.0
        %1101 = vmatprep.subr.mxu0 0.0
        %1102 = vmatpush1.msra.mxu0 0.0
        %1103 = vmatprep.subr.mxu0 0.0
        %1104 = vmatpush1.msra.mxu0 0.0
        %1105 = vmatprep.subr.mxu0 0.0
        %1106 = vmatpush1.msra.mxu0 0.0
        %1107 = vmatprep.subr.mxu0 0.0
        %1108 = vmatpush1.msra.mxu0 0.0
        %1109 = vmatprep.subr.mxu0 0.0
        %1110 = vmatpush1.msra.mxu0 0.0
        %1111 = vmatprep.mubr.f32.mxu0 0.0
        %1112 = vmatmul.mubr.f32.gmra.mrb[0].mxu0 %v1045
        %v1113 = vpop.f32.mrb[0].mxu0
        %v1114 = vadd.f32 0.0, %v1113
        %v1115 = vpop.f32.mrb[0].mxu0
        %1116 = vdwg.mxu0
        %v1117 = vrcp.pop %v1039
        %v1118 = vmul.f32 %v1114, %v1117
        %s1119 = scalar_lea.vmem [#allocation3], 8
        %v1120 = vld [vmem:[%s1119] sm:$0xff]
        %v1122 = vsel %vm630, %v1118, 0
        %1124 = vmatprep.subr.mxu0 0.0
        %1125 = vmatpush1.msra.mxu0 %v537
        %1126 = vmatprep.subr.mxu0 0.0
        %1127 = vmatpush1.msra.mxu0 0.0
        %1128 = vmatprep.subr.mxu0 0.0
        %1129 = vmatpush1.msra.mxu0 0.0
        %1130 = vmatprep.subr.mxu0 0.0
        %1131 = vmatpush1.msra.mxu0 0.0
        %1132 = vmatprep.subr.mxu0 0.0
        %1133 = vmatpush1.msra.mxu0 0.0
        %1134 = vmatprep.subr.mxu0 0.0
        %1135 = vmatpush1.msra.mxu0 0.0
        %1136 = vmatprep.subr.mxu0 0.0
        %1137 = vmatpush1.msra.mxu0 0.0
        %1138 = vmatprep.subr.mxu0 0.0
        %1139 = vmatpush1.msra.mxu0 0.0
        %1140 = vmatprep.subr.mxu0 0.0
        %1141 = vmatpush1.msra.mxu0 0.0
        %1142 = vmatprep.subr.mxu0 0.0
        %1143 = vmatpush1.msra.mxu0 0.0
        %1144 = vmatprep.subr.mxu0 0.0
        %1145 = vmatpush1.msra.mxu0 0.0
        %1146 = vmatprep.subr.mxu0 0.0
        %1147 = vmatpush1.msra.mxu0 0.0
        %1148 = vmatprep.subr.mxu0 0.0
        %1149 = vmatpush1.msra.mxu0 0.0
        %1150 = vmatprep.subr.mxu0 0.0
        %1151 = vmatpush1.msra.mxu0 0.0
        %1152 = vmatprep.subr.mxu0 0.0
        %1153 = vmatpush1.msra.mxu0 0.0
        %1154 = vmatprep.subr.mxu0 0.0
        %1155 = vmatpush1.msra.mxu0 0.0
        %1156 = vmatprep.subr.mxu0 0.0
        %1157 = vmatpush1.msra.mxu0 0.0
        %1158 = vmatprep.subr.mxu0 0.0
        %1159 = vmatpush1.msra.mxu0 0.0
        %1160 = vmatprep.subr.mxu0 0.0
        %1161 = vmatpush1.msra.mxu0 0.0
        %1162 = vmatprep.subr.mxu0 0.0
        %1163 = vmatpush1.msra.mxu0 0.0
        %1164 = vmatprep.subr.mxu0 0.0
        %1165 = vmatpush1.msra.mxu0 0.0
        %1166 = vmatprep.subr.mxu0 0.0
        %1167 = vmatpush1.msra.mxu0 0.0
        %1168 = vmatprep.subr.mxu0 0.0
        %1169 = vmatpush1.msra.mxu0 0.0
        %1170 = vmatprep.subr.mxu0 0.0
        %1171 = vmatpush1.msra.mxu0 0.0
        %1172 = vmatprep.subr.mxu0 0.0
        %1173 = vmatpush1.msra.mxu0 0.0
        %1174 = vmatprep.subr.mxu0 0.0
        %1175 = vmatpush1.msra.mxu0 0.0
        %1176 = vmatprep.subr.mxu0 0.0
        %1177 = vmatpush1.msra.mxu0 0.0
        %1178 = vmatprep.subr.mxu0 0.0
        %1179 = vmatpush1.msra.mxu0 0.0
        %1180 = vmatprep.subr.mxu0 0.0
        %1181 = vmatpush1.msra.mxu0 0.0
        %1182 = vmatprep.subr.mxu0 0.0
        %1183 = vmatpush1.msra.mxu0 0.0
        %1184 = vmatprep.subr.mxu0 0.0
        %1185 = vmatpush1.msra.mxu0 0.0
        %1186 = vmatprep.subr.mxu0 0.0
        %1187 = vmatpush1.msra.mxu0 0.0
        %1188 = vmatprep.mubr.f32.mxu0 0.0
        %1189 = vmatmul.mubr.f32.gmra.mrb[0].mxu0 %v1122
        %v1190 = vpop.f32.mrb[0].mxu0
        %v1191 = vadd.f32 0.0, %v1190
        %v1192 = vpop.f32.mrb[0].mxu0
        %1193 = vdwg.mxu0
        %v1194 = vadd.f32 %v1120, %v1191
        %1195 = vst.msk [vmem:[%s1119] sm:$0xff] %vm545, %v1194
        %p1196 = scmp.eq.s32.totalorder %s26, 3
        // Predicated region
        $region99: #{tpu_custom_call.1} parent=89 // pred_check
          %p1197 = pneg %p1196
        $region100: #{tpu_custom_call.1} parent=89 // pred_check_branch
          %1199 = sbr.rel (%p1197) target = $region102
        $region101: #{tpu_custom_call.1} parent=89 // pred_region
          %v1200 = vld [vmem:[#allocation3] sm:$0xff]
          %v1201 = vld [vmem:[#allocation3 + $0x8] sm:$0xff]
          %v1202 = vld [vmem:[%s8] sm:$0x1]
          %v1204 = vlaneseq
          %v1205 = vshrl.u32 %v1204, 7
          %v1206 = vsub.s32 0, %v1205
          %v1207 = vrot.slane %v1202, %v1206
          %v1209 = vadd.f32 %v1200, %v1207
          %v1210 = vadd.f32 %v1201, %v1207
          %1211 = vst.msk [vmem:[#allocation5] sm:$0xff] %vm545, %v1209
          %1212 = vst.msk [vmem:[#allocation5 + $0x8] sm:$0xff] %vm545, %v1210
        $region102: #{tpu_custom_call.1} parent=89 // pred_fallthru
          _
        // Predicated region
        $region103: #{tpu_custom_call.1} parent=89 // pred_check
          %p1213 = pneg %p272
        $region104: #{tpu_custom_call.1} parent=89 // pred_check_branch
          %1215 = sbr.rel (%p1213) target = $region106
        $region105: #{tpu_custom_call.1} parent=89 // pred_region
          %s1216 = smul.u32 2, %s25
          %s1218 = ssub.s32 256, 256
          %1219 = vsyncadd [#allocation6], %s1218
          %s1220 = smul.addr %s1216, 128
          %s1221 = scalar_lea.hbm %s9, %s1220
          %s1222 = sshll.u32 [#allocation5], 4
          %s1223 = int_to_ptr.vmem [resolvable:$true] %s1222
          %1228 = dma.vmem_to_hbm [thread:$0]  %s1223, 256, %s1221, [#allocation6], 128, 128, 8
        $region106: #{tpu_custom_call.1} parent=89 // pred_fallthru
          _
        // Predicated region
        $region107: #{tpu_custom_call.1} parent=89 // pred_check
          %p1229 = pneg %p272
        $region108: #{tpu_custom_call.1} parent=89 // pred_check_branch
          %1231 = sbr.rel (%p1229) target = $region110
        $region109: #{tpu_custom_call.1} parent=89 // pred_region
          %1232 = dma.done [#allocation6], 256
        $region110: #{tpu_custom_call.1} parent=89 // pred_fallthru
          _
      $region90: #{tpu_custom_call.1} parent=5 // pred_fallthru
        _
      %p1233 = scmp.le.s32.totalorder 2, %s16
      // Predicated region
      $region111: #{tpu_custom_call.1} parent=5 // pred_check
        %p1234 = pneg %p1233
      $region112: #{tpu_custom_call.1} parent=5 // pred_check_branch
        %1236 = sbr.rel (%p1234) target = $region114
      $region113: #{tpu_custom_call.1} parent=5 // pred_region
        %s1237 = ssub.s32 %s16, 2
      $region114: #{tpu_custom_call.1} parent=5 // pred_fallthru
        _
    $region6: #{tpu_custom_call.1} parent=1 // loop_footer
      %s20 = sadd.s32 1, %s16
    $region7: #{tpu_custom_call.1} parent=1 // loop_footer_branch
      %15 = sbr.rel target = $region3
    $region8: #{tpu_custom_call.1} parent=1 // loop_exit
      _
    %1238 = vsyncpa [#allocation6], 1
    %s1239 = scalar_lea.sflag [#allocation6], 1
    %1240 = vsyncpa %s1239, 1

</llo_original>
